<compile_context>
chip_gen: v7x
topology: tpu7x:2x2x1
jax: 0.10.0
libtpu: 0.0.40
codegen_flags: <defaults>
</compile_context>

<pallas_src>
import functools
import math

import jax
import jax.numpy as jnp
import numpy as np
from jax.experimental import pallas as pl
from jax.experimental.pallas import tpu as pltpu


# ---------------------------------------------------------------------------
# FIR taps (compile-time constants)
# ---------------------------------------------------------------------------
def kernel_sampling_taps(zeros: int):
    """Taps of kernel_sampling(zeros) as Python floats.

    hann(4z+1, periodic=False)[1::2] * sinc(t), t = linspace(-z+0.5, z-0.5, 2z),
    with sinc(t) = sin(pi t)/(pi t)  (the torch<1.8 branch evaluated at t*pi,
    i.e. the classic Demucs interpolation filter).
    """
    assert zeros >= 1
    win = np.hanning(4 * zeros + 1)          # == torch.hann_window(periodic=False)
    winodd = win[1::2]                       # length 2*zeros
    t = np.linspace(-zeros + 0.5, zeros - 0.5, 2 * zeros)
    taps = np.sinc(t) * winodd
    return tuple(float(v) for v in taps)


def _round_up(x: int, m: int) -> int:
    return (x + m - 1) // m * m


def _pick_block(total: int, desired: int, quantum: int) -> int:
    """Largest multiple of `quantum` <= min(desired, total) that divides `total`."""
    cap = max(quantum, min(desired, total))
    cap = (cap // quantum) * quantum
    for b in range(cap, quantum - 1, -quantum):
        if total % b == 0:
            return b
    return quantum


def _vmem_capacity_bytes() -> int:
    """Generation-aware VMEM capacity (v5e/v6e: 128 MiB, v7x: 64 MiB/core)."""
    try:
        info = pltpu.get_tpu_info()
        for name in ("vmem_capacity_bytes", "vmem_size_bytes", "vmem_bytes"):
            val = getattr(info, name, None)
            if val:
                return int(val)
    except Exception:
        pass
    return 64 * 2 ** 20   # conservative fallback (v7x per-TensorCore)


def _split_bf16(x_f32):
    """2-way bf16 split: x ~= hi + lo with |error| <= ~2^-18 |x|."""
    hi = x_f32.astype(jnp.bfloat16)
    lo = (x_f32 - hi.astype(jnp.float32)).astype(jnp.bfloat16)
    return hi, lo


def _band_matrix(zeros: int, ci: int, kw: int) -> np.ndarray:
    """(kw, 2*ci) band matrix fusing the FIR with the even/odd interleave.

    Slab column s holds x[chunk_base + 1 - zeros + s].
    Output column 2*i   = x[chunk_base + i]                 (pass-through)
    Output column 2*i+1 = sum_k x[chunk_base + i + 1 + k - zeros] * w[k]
    """
    taps = kernel_sampling_taps(zeros)
    w = np.zeros((kw, 2 * ci), np.float32)
    for i in range(ci):
        w[i + zeros - 1, 2 * i] = 1.0
        for k, wk in enumerate(taps):
            w[i + k, 2 * i + 1] = wk
    return w


# ---------------------------------------------------------------------------
# Pallas kernel: fused (FIR + upsample-by-2 interleave) via banded MXU matmuls
# ---------------------------------------------------------------------------
def _upsample2_kernel(cur_ref, left_ref, right_ref, whi_ref, wlo_ref, out_ref,
                      win_hi, win_lo, *, zeros, t_blk, ci, kw):
    r_blk = cur_ref.shape[0]
    j = pl.program_id(1)
    n_t = pl.num_programs(1)

    # Assemble the zero-padded bf16 hi/lo windows in VMEM:
    #   cols [0, 128)                 : 128-chunk just before this tile (left halo)
    #   cols [128, 128 + t_blk)       : current tile
    #   cols [128+t_blk, t_blk+256)   : 128-chunk just after this tile (right halo)
    hi, lo = _split_bf16(cur_ref[...])
    win_hi[:, pl.ds(128, t_blk)] = hi
    win_lo[:, pl.ds(128, t_blk)] = lo
    hi, lo = _split_bf16(left_ref[...])
    win_hi[:, pl.ds(0, 128)] = hi
    win_lo[:, pl.ds(0, 128)] = lo
    hi, lo = _split_bf16(right_ref[...])
    win_hi[:, pl.ds(128 + t_blk, 128)] = hi
    win_lo[:, pl.ds(128 + t_blk, 128)] = lo

    zero_chunk = jnp.zeros((r_blk, 128), jnp.bfloat16)

    @pl.when(j == 0)                    # left of the signal -> zero padding
    def _():
        win_hi[:, pl.ds(0, 128)] = zero_chunk
        win_lo[:, pl.ds(0, 128)] = zero_chunk

    @pl.when(j == n_t - 1)              # right of the signal -> zero padding
    def _():
        win_hi[:, pl.ds(128 + t_blk, 128)] = zero_chunk
        win_lo[:, pl.ds(128 + t_blk, 128)] = zero_chunk

    w_hi = whi_ref[...]
    w_lo = wlo_ref[...]

    # Per ci-wide input chunk: one banded GEMM -> 2*ci interleaved output lanes.
    # bf16x2 split (3 GEMMs) keeps ~f32 accuracy on the MXU's native bf16 path;
    # output stores are aligned and lane-dense (128/256 wide).
    for c in range(t_blk // ci):
        s0 = c * ci + 129 - zeros       # static slab offset into the window
        a_hi = win_hi[:, pl.ds(s0, kw)]
        a_lo = win_lo[:, pl.ds(s0, kw)]
        y = jnp.dot(a_hi, w_hi, preferred_element_type=jnp.float32)
        y = y + jnp.dot(a_hi, w_lo, preferred_element_type=jnp.float32)
        y = y + jnp.dot(a_lo, w_hi, preferred_element_type=jnp.float32)
        out_ref[:, pl.ds(2 * c * ci, 2 * ci)] = y


def _upsample2(x, zeros, r_blk, t_blk):
    """x: (Rp, Tp) f32 -> (Rp, 2*Tp) f32 interleaved upsample-by-2."""
    Rp, Tp = x.shape
    assert 1 <= zeros <= 64, "band/halo scheme assumes zeros <= 64 (Demucs: 56)"
    assert t_blk % 128 == 0 and Tp % t_blk == 0 and Rp % r_blk == 0

    ci = 64 if zeros <= 32 else 128      # input samples per GEMM chunk
    kw = 128 if zeros <= 32 else 256     # GEMM contraction width (>= ci + 2*zeros - 1)

    w = jnp.asarray(_band_matrix(zeros, ci, kw))
    w_hi, w_lo = _split_bf16(w)

    nb = t_blk // 128                    # 128-chunks per time tile
    n128 = Tp // 128                     # total 128-chunks
    grid = (Rp // r_blk, Tp // t_blk)

    kern = functools.partial(_upsample2_kernel, zeros=zeros, t_blk=t_blk,
                             ci=ci, kw=kw)

    # VMEM budget: double-buffered blocks + bf16 hi/lo window scratch (+ margin),
    # clamped to the generation's capacity (64 MiB/core on v7x).
    blk_bytes = (4 * r_blk * t_blk            # cur
                 + 2 * 4 * r_blk * 128        # left/right halos
                 + 2 * 2 * kw * 2 * ci        # W hi/lo
                 + 4 * r_blk * 2 * t_blk)     # out
    need = 2 * blk_bytes + 2 * 2 * r_blk * (t_blk + 256)
    cap = _vmem_capacity_bytes()
    vmem_limit = int(max(need + (4 << 20), min(need + (16 << 20), cap // 2)))

    return pl.pallas_call(
        kern,
        out_shape=jax.ShapeDtypeStruct((Rp, 2 * Tp), jnp.float32),
        grid_spec=pltpu.PrefetchScalarGridSpec(
            num_scalar_prefetch=0,
            grid=grid,
            in_specs=[
                # current time tile
                pl.BlockSpec((r_blk, t_blk), lambda i, j: (i, j)),
                # 128-wide chunk ending at the tile start (left halo, clamped)
                pl.BlockSpec((r_blk, 128),
                             lambda i, j: (i, jnp.maximum(j * nb - 1, 0))),
                # 128-wide chunk starting at the tile end (right halo, clamped)
                pl.BlockSpec((r_blk, 128),
                             lambda i, j: (i, jnp.minimum(j * nb + nb, n128 - 1))),
                # banded weight matrices (constant block, fetched once)
                pl.BlockSpec((kw, 2 * ci), lambda i, j: (0, 0)),
                pl.BlockSpec((kw, 2 * ci), lambda i, j: (0, 0)),
            ],
            out_specs=pl.BlockSpec((r_blk, 2 * t_blk), lambda i, j: (i, j)),
            scratch_shapes=[pltpu.VMEM((r_blk, t_blk + 256), jnp.bfloat16),
                            pltpu.VMEM((r_blk, t_blk + 256), jnp.bfloat16)],
        ),
        compiler_params=pltpu.CompilerParams(
            dimension_semantics=("parallel", "parallel"),
            vmem_limit_bytes=vmem_limit),
    )(x, x, x, w_hi, w_lo)


# ---------------------------------------------------------------------------
# One re-sampling stage (Demucs upsample-by-2 flavour of `filter`)
# ---------------------------------------------------------------------------
def sampling_stage(signal, zeros, *, row_block=256, time_block=2048):
    B, C, T = signal.shape
    R = B * C
    x = signal.reshape(R, T).astype(jnp.float32)

    # Pad rows to a multiple of 8 and time to a multiple of 128 so the kernel
    # only ever emits lane-dense, unmasked stores; pick tiles dividing extents.
    Rp = _round_up(R, 8)
    Tp = _round_up(T, 128)
    r_blk = _pick_block(Rp, row_block, 8)
    t_blk = _pick_block(Tp, time_block, 128)

    if (Rp, Tp) != (R, T):
        x = jnp.pad(x, ((0, Rp - R), (0, Tp - T)))
    # TODO(synk): fold the tail pad/crop into the kernel (masked final tile)
    #             to avoid these extra HBM passes when T % 128 != 0.

    y = _upsample2(x, zeros, r_blk, t_blk)       # (Rp, 2*Tp), already interleaved
    return y[:R, :2 * T].reshape(B, C, 2 * T)


def sampling_base_forward(signal, zeros, factor, *, row_block=256,
                          time_block=2048):
    """SamplingBase.forward: apply `filter` log2(factor) times."""
    stages = int(math.log2(factor))
    for _ in range(stages):
        signal = sampling_stage(signal, zeros, row_block=row_block,
                                time_block=time_block)
    # TODO(synk): polyphase-collapse consecutive stages to avoid materializing
    #             the interleaved intermediate in HBM.
    return signal


# ---------------------------------------------------------------------------
# Pure-JAX references (correctness checks only)
# ---------------------------------------------------------------------------
def _ref_forward(signal, zeros, factor):
    """Exact f32 reference (mirrors the PyTorch module)."""
    w = jnp.asarray(kernel_sampling_taps(zeros), jnp.float32)
    for _ in range(int(math.log2(factor))):
        B, C, T = signal.shape
        x = signal.reshape(B * C, T).astype(jnp.float32)
        xpad = jnp.pad(x, ((0, 0), (zeros, zeros)))
        out = sum(xpad[:, 1 + k:1 + k + T] * w[k] for k in range(2 * zeros))
        signal = jnp.stack([x, out], axis=-1).reshape(B, C, 2 * T)
    return signal


def _ref_forward_bf16x2(signal, zeros, factor):
    """Reference mirroring the kernel's bf16 hi/lo split arithmetic exactly
    (tight structural check of tap placement, halos, padding, interleave)."""
    w = jnp.asarray(kernel_sampling_taps(zeros), jnp.float32)
    wh, wl = _split_bf16(w)
    wh, wl = wh.astype(jnp.float32), wl.astype(jnp.float32)
    for _ in range(int(math.log2(factor))):
        B, C, T = signal.shape
        x = signal.reshape(B * C, T).astype(jnp.float32)
        xh, xl = _split_bf16(x)
        xh, xl = xh.astype(jnp.float32), xl.astype(jnp.float32)
        xh_p = jnp.pad(xh, ((0, 0), (zeros, zeros)))
        xl_p = jnp.pad(xl, ((0, 0), (zeros, zeros)))
        out = sum(xh_p[:, 1 + k:1 + k + T] * wh[k]
                  + xh_p[:, 1 + k:1 + k + T] * wl[k]
                  + xl_p[:, 1 + k:1 + k + T] * wh[k]
                  for k in range(2 * zeros))
        signal = jnp.stack([xh + xl, out], axis=-1).reshape(B, C, 2 * T)
    return signal


if __name__ == "__main__":
    key = jax.random.PRNGKey(0)

    # Case 1: small-zeros band (ci=64, K=128), 2 filter stages, T not a multiple
    # of 128; time_block=128 forces several time tiles so the halo logic runs.
    ZEROS, FACTOR = 8, 4
    B, C, T = 2, 4, 200
    sig = jax.random.normal(key, (B, C, T), dtype=jnp.float32)
    fwd = jax.jit(functools.partial(sampling_base_forward, zeros=ZEROS,
                                    factor=FACTOR, time_block=128))
    y = jax.block_until_ready(fwd(sig))
    assert y.shape == (B, C, T * FACTOR), y.shape

    # Structural check: identical bf16x2 split arithmetic in pure JAX (tight).
    y_b16 = _ref_forward_bf16x2(sig, ZEROS, FACTOR)
    assert jnp.allclose(y, y_b16, atol=5e-5, rtol=5e-5), \
        float(jnp.max(jnp.abs(y - y_b16)))
    # Semantic check vs the exact f32 reference: the bf16x2 (3-GEMM) split has a
    # worst-case error of ~1e-4 absolute over two stages for N(0,1) inputs.
    y_f32 = _ref_forward(sig, ZEROS, FACTOR)
    assert jnp.allclose(y, y_f32, atol=5e-4, rtol=5e-4), \
        float(jnp.max(jnp.abs(y - y_f32)))

    # Case 2: single time tile (both halos zeroed in the same grid step).
    sig2 = jax.random.normal(jax.random.PRNGKey(1), (1, 3, 96), jnp.float32)
    y2 = jax.block_until_ready(
        jax.jit(functools.partial(sampling_base_forward, zeros=8, factor=2))(sig2))
    assert jnp.allclose(y2, _ref_forward(sig2, 8, 2), atol=5e-4, rtol=5e-4)

    # Case 3: real Demucs filter length (zeros=56 -> ci=128, K=256 band).
    sig3 = jax.random.normal(jax.random.PRNGKey(2), (2, 2, 300), jnp.float32)
    y3 = jax.block_until_ready(
        jax.jit(functools.partial(sampling_base_forward, zeros=56, factor=2,
                                  time_block=128))(sig3))
    assert jnp.allclose(y3, _ref_forward(sig3, 56, 2), atol=5e-4, rtol=5e-4)

    print("KERNEL_OK")
</pallas_src>

<mosaic_0001>
module attributes {stable_mosaic.version = 11 : i64} {
  func.func @_upsample2_kernel(%arg0: i32, %arg1: i32, %arg2: memref<8x128xf32, #tpu.memory_space<vmem>>, %arg3: memref<8x128xf32, #tpu.memory_space<vmem>>, %arg4: memref<8x128xf32, #tpu.memory_space<vmem>>, %arg5: memref<128x128xbf16, #tpu.memory_space<vmem>>, %arg6: memref<128x128xbf16, #tpu.memory_space<vmem>>, %arg7: memref<8x256xf32, #tpu.memory_space<vmem>>, %arg8: memref<8x384xbf16, #tpu.memory_space<vmem>>, %arg9: memref<8x384xbf16, #tpu.memory_space<vmem>>) attributes {dimension_semantics = [#tpu.dimension_semantics<parallel>, #tpu.dimension_semantics<parallel>], iteration_bounds = array<i64: 1, 2>, scalar_prefetch = 0 : i64, scratch_operands = 2 : i64, tpu.core_type = #tpu.core_type<tc>, window_params = [{transform_indices = @transform_0, window_bounds = array<i64: 8, 128>}, {transform_indices = @transform_1, window_bounds = array<i64: 8, 128>}, {transform_indices = @transform_2, window_bounds = array<i64: 8, 128>}, {pipeline_mode = #tpu.pipeline_mode<synchronous>, transform_indices = @transform_3, window_bounds = array<i64: 128, 128>}, {pipeline_mode = #tpu.pipeline_mode<synchronous>, transform_indices = @transform_4, window_bounds = array<i64: 128, 128>}, {transform_indices = @transform_5, window_bounds = array<i64: 8, 256>}]} {
    %c0 = arith.constant 0 : index
    %c0_0 = arith.constant 0 : index
    %0 = vector.load %arg2[%c0, %c0_0] : memref<8x128xf32, #tpu.memory_space<vmem>>, vector<8x128xf32>
    %1 = arith.truncf %0 : vector<8x128xf32> to vector<8x128xbf16>
    %2 = arith.extf %1 : vector<8x128xbf16> to vector<8x128xf32>
    %3 = arith.subf %0, %2 : vector<8x128xf32>
    %4 = arith.truncf %3 : vector<8x128xf32> to vector<8x128xbf16>
    %c0_1 = arith.constant 0 : index
    %c128 = arith.constant 128 : index
    %5 = vector.load %arg8[%c0_1, %c128] : memref<8x384xbf16, #tpu.memory_space<vmem>>, vector<8x128xbf16>
    tpu.vector_store %arg8[%c0_1, %c128], %1 {strides = array<i32>} : memref<8x384xbf16, #tpu.memory_space<vmem>>, vector<8x128xbf16>,
    %c0_2 = arith.constant 0 : index
    %c128_3 = arith.constant 128 : index
    %6 = vector.load %arg9[%c0_2, %c128_3] : memref<8x384xbf16, #tpu.memory_space<vmem>>, vector<8x128xbf16>
    tpu.vector_store %arg9[%c0_2, %c128_3], %4 {strides = array<i32>} : memref<8x384xbf16, #tpu.memory_space<vmem>>, vector<8x128xbf16>,
    %c0_4 = arith.constant 0 : index
    %c0_5 = arith.constant 0 : index
    %7 = vector.load %arg3[%c0_4, %c0_5] : memref<8x128xf32, #tpu.memory_space<vmem>>, vector<8x128xf32>
    %8 = arith.truncf %7 : vector<8x128xf32> to vector<8x128xbf16>
    %9 = arith.extf %8 : vector<8x128xbf16> to vector<8x128xf32>
    %10 = arith.subf %7, %9 : vector<8x128xf32>
    %11 = arith.truncf %10 : vector<8x128xf32> to vector<8x128xbf16>
    %c0_6 = arith.constant 0 : index
    %c0_7 = arith.constant 0 : index
    %12 = vector.load %arg8[%c0_6, %c0_7] : memref<8x384xbf16, #tpu.memory_space<vmem>>, vector<8x128xbf16>
    tpu.vector_store %arg8[%c0_6, %c0_7], %8 {strides = array<i32>} : memref<8x384xbf16, #tpu.memory_space<vmem>>, vector<8x128xbf16>,
    %c0_8 = arith.constant 0 : index
    %c0_9 = arith.constant 0 : index
    %13 = vector.load %arg9[%c0_8, %c0_9] : memref<8x384xbf16, #tpu.memory_space<vmem>>, vector<8x128xbf16>
    tpu.vector_store %arg9[%c0_8, %c0_9], %11 {strides = array<i32>} : memref<8x384xbf16, #tpu.memory_space<vmem>>, vector<8x128xbf16>,
    %c0_10 = arith.constant 0 : index
    %c0_11 = arith.constant 0 : index
    %14 = vector.load %arg4[%c0_10, %c0_11] : memref<8x128xf32, #tpu.memory_space<vmem>>, vector<8x128xf32>
    %15 = arith.truncf %14 : vector<8x128xf32> to vector<8x128xbf16>
    %16 = arith.extf %15 : vector<8x128xbf16> to vector<8x128xf32>
    %17 = arith.subf %14, %16 : vector<8x128xf32>
    %18 = arith.truncf %17 : vector<8x128xf32> to vector<8x128xbf16>
    %c0_12 = arith.constant 0 : index
    %c256 = arith.constant 256 : index
    %19 = vector.load %arg8[%c0_12, %c256] : memref<8x384xbf16, #tpu.memory_space<vmem>>, vector<8x128xbf16>
    tpu.vector_store %arg8[%c0_12, %c256], %15 {strides = array<i32>} : memref<8x384xbf16, #tpu.memory_space<vmem>>, vector<8x128xbf16>,
    %c0_13 = arith.constant 0 : index
    %c256_14 = arith.constant 256 : index
    %20 = vector.load %arg9[%c0_13, %c256_14] : memref<8x384xbf16, #tpu.memory_space<vmem>>, vector<8x128xbf16>
    tpu.vector_store %arg9[%c0_13, %c256_14], %18 {strides = array<i32>} : memref<8x384xbf16, #tpu.memory_space<vmem>>, vector<8x128xbf16>,
    %cst = arith.constant 0.000000e+00 : bf16
    %21 = vector.broadcast %cst : bf16 to vector<8x128xbf16>
    %c0_i32 = arith.constant 0 : i32
    %22 = arith.cmpi eq, %arg1, %c0_i32 : i32
    %23 = arith.extui %22 : i1 to i32
    %c0_i32_15 = arith.constant 0 : i32
    %24 = arith.cmpi ne, %23, %c0_i32_15 : i32
    scf.if %24 {
      %c0_37 = arith.constant 0 : index
      %c0_38 = arith.constant 0 : index
      %46 = vector.load %arg8[%c0_37, %c0_38] : memref<8x384xbf16, #tpu.memory_space<vmem>>, vector<8x128xbf16>
      tpu.vector_store %arg8[%c0_37, %c0_38], %21 {strides = array<i32>} : memref<8x384xbf16, #tpu.memory_space<vmem>>, vector<8x128xbf16>,
      %c0_39 = arith.constant 0 : index
      %c0_40 = arith.constant 0 : index
      %47 = vector.load %arg9[%c0_39, %c0_40] : memref<8x384xbf16, #tpu.memory_space<vmem>>, vector<8x128xbf16>
      tpu.vector_store %arg9[%c0_39, %c0_40], %21 {strides = array<i32>} : memref<8x384xbf16, #tpu.memory_space<vmem>>, vector<8x128xbf16>,
    } else {
    }
    %c1_i32 = arith.constant 1 : i32
    %25 = arith.cmpi eq, %arg1, %c1_i32 : i32
    %26 = arith.extui %25 : i1 to i32
    %c0_i32_16 = arith.constant 0 : i32
    %27 = arith.cmpi ne, %26, %c0_i32_16 : i32
    scf.if %27 {
      %c0_37 = arith.constant 0 : index
      %c256_38 = arith.constant 256 : index
      %46 = vector.load %arg8[%c0_37, %c256_38] : memref<8x384xbf16, #tpu.memory_space<vmem>>, vector<8x128xbf16>
      tpu.vector_store %arg8[%c0_37, %c256_38], %21 {strides = array<i32>} : memref<8x384xbf16, #tpu.memory_space<vmem>>, vector<8x128xbf16>,
      %c0_39 = arith.constant 0 : index
      %c256_40 = arith.constant 256 : index
      %47 = vector.load %arg9[%c0_39, %c256_40] : memref<8x384xbf16, #tpu.memory_space<vmem>>, vector<8x128xbf16>
      tpu.vector_store %arg9[%c0_39, %c256_40], %21 {strides = array<i32>} : memref<8x384xbf16, #tpu.memory_space<vmem>>, vector<8x128xbf16>,
    } else {
    }
    %c0_17 = arith.constant 0 : index
    %c0_18 = arith.constant 0 : index
    %28 = vector.load %arg5[%c0_17, %c0_18] : memref<128x128xbf16, #tpu.memory_space<vmem>>, vector<128x128xbf16>
    %c0_19 = arith.constant 0 : index
    %c0_20 = arith.constant 0 : index
    %29 = vector.load %arg6[%c0_19, %c0_20] : memref<128x128xbf16, #tpu.memory_space<vmem>>, vector<128x128xbf16>
    %c0_21 = arith.constant 0 : index
    %c121 = arith.constant 121 : index
    %30 = vector.load %arg8[%c0_21, %c121] : memref<8x384xbf16, #tpu.memory_space<vmem>>, vector<8x128xbf16>
    %c0_22 = arith.constant 0 : index
    %c121_23 = arith.constant 121 : index
    %31 = vector.load %arg9[%c0_22, %c121_23] : memref<8x384xbf16, #tpu.memory_space<vmem>>, vector<8x128xbf16>
    %cst_24 = arith.constant dense<0.000000e+00> : vector<8x128xf32>
    %32 = tpu.matmul %30, %28, %cst_24 {dimension_numbers = #tpu.dot_dimension_numbers<[1], [0], [0], [1], [0, 0, 1, 1], [], []>} : vector<8x128xbf16>, vector<128x128xbf16>, vector<8x128xf32> -> vector<8x128xf32>
    %cst_25 = arith.constant dense<0.000000e+00> : vector<8x128xf32>
    %33 = tpu.matmul %30, %29, %cst_25 {dimension_numbers = #tpu.dot_dimension_numbers<[1], [0], [0], [1], [0, 0, 1, 1], [], []>} : vector<8x128xbf16>, vector<128x128xbf16>, vector<8x128xf32> -> vector<8x128xf32>
    %34 = arith.addf %32, %33 : vector<8x128xf32>
    %cst_26 = arith.constant dense<0.000000e+00> : vector<8x128xf32>
    %35 = tpu.matmul %31, %28, %cst_26 {dimension_numbers = #tpu.dot_dimension_numbers<[1], [0], [0], [1], [0, 0, 1, 1], [], []>} : vector<8x128xbf16>, vector<128x128xbf16>, vector<8x128xf32> -> vector<8x128xf32>
    %36 = arith.addf %34, %35 : vector<8x128xf32>
    %c0_27 = arith.constant 0 : index
    %c0_28 = arith.constant 0 : index
    %37 = vector.load %arg7[%c0_27, %c0_28] : memref<8x256xf32, #tpu.memory_space<vmem>>, vector<8x128xf32>
    tpu.vector_store %arg7[%c0_27, %c0_28], %36 {strides = array<i32>} : memref<8x256xf32, #tpu.memory_space<vmem>>, vector<8x128xf32>,
    %c0_29 = arith.constant 0 : index
    %c185 = arith.constant 185 : index
    %38 = vector.load %arg8[%c0_29, %c185] : memref<8x384xbf16, #tpu.memory_space<vmem>>, vector<8x128xbf16>
    %c0_30 = arith.constant 0 : index
    %c185_31 = arith.constant 185 : index
    %39 = vector.load %arg9[%c0_30, %c185_31] : memref<8x384xbf16, #tpu.memory_space<vmem>>, vector<8x128xbf16>
    %cst_32 = arith.constant dense<0.000000e+00> : vector<8x128xf32>
    %40 = tpu.matmul %38, %28, %cst_32 {dimension_numbers = #tpu.dot_dimension_numbers<[1], [0], [0], [1], [0, 0, 1, 1], [], []>} : vector<8x128xbf16>, vector<128x128xbf16>, vector<8x128xf32> -> vector<8x128xf32>
    %cst_33 = arith.constant dense<0.000000e+00> : vector<8x128xf32>
    %41 = tpu.matmul %38, %29, %cst_33 {dimension_numbers = #tpu.dot_dimension_numbers<[1], [0], [0], [1], [0, 0, 1, 1], [], []>} : vector<8x128xbf16>, vector<128x128xbf16>, vector<8x128xf32> -> vector<8x128xf32>
    %42 = arith.addf %40, %41 : vector<8x128xf32>
    %cst_34 = arith.constant dense<0.000000e+00> : vector<8x128xf32>
    %43 = tpu.matmul %39, %28, %cst_34 {dimension_numbers = #tpu.dot_dimension_numbers<[1], [0], [0], [1], [0, 0, 1, 1], [], []>} : vector<8x128xbf16>, vector<128x128xbf16>, vector<8x128xf32> -> vector<8x128xf32>
    %44 = arith.addf %42, %43 : vector<8x128xf32>
    %c0_35 = arith.constant 0 : index
    %c128_36 = arith.constant 128 : index
    %45 = vector.load %arg7[%c0_35, %c128_36] : memref<8x256xf32, #tpu.memory_space<vmem>>, vector<8x128xf32>
    tpu.vector_store %arg7[%c0_35, %c128_36], %44 {strides = array<i32>} : memref<8x256xf32, #tpu.memory_space<vmem>>, vector<8x128xf32>,
    return
  }
  func.func @transform_0(%arg0: i32, %arg1: i32) -> (i32, i32) {
    %c0_i32 = arith.constant 0 : i32
    return %arg0, %arg1 : i32, i32
  }
  func.func @transform_1(%arg0: i32, %arg1: i32) -> (i32, i32) {
    %c1_i32 = arith.constant 1 : i32
    %0 = arith.muli %arg1, %c1_i32 : i32
    %c1_i32_0 = arith.constant 1 : i32
    %1 = arith.subi %0, %c1_i32_0 : i32
    %c0_i32 = arith.constant 0 : i32
    %2 = arith.maxsi %1, %c0_i32 : i32
    %c0_i32_1 = arith.constant 0 : i32
    return %arg0, %2 : i32, i32
  }
  func.func @transform_2(%arg0: i32, %arg1: i32) -> (i32, i32) {
    %c1_i32 = arith.constant 1 : i32
    %0 = arith.muli %arg1, %c1_i32 : i32
    %c1_i32_0 = arith.constant 1 : i32
    %1 = arith.addi %0, %c1_i32_0 : i32
    %c1_i32_1 = arith.constant 1 : i32
    %2 = arith.minsi %1, %c1_i32_1 : i32
    %c0_i32 = arith.constant 0 : i32
    return %arg0, %2 : i32, i32
  }
  func.func @transform_3(%arg0: i32, %arg1: i32) -> (i32, i32) {
    %c0_i32 = arith.constant 0 : i32
    %c0_i32_0 = arith.constant 0 : i32
    %c0_i32_1 = arith.constant 0 : i32
    return %c0_i32, %c0_i32_0 : i32, i32
  }
  func.func @transform_4(%arg0: i32, %arg1: i32) -> (i32, i32) {
    %c0_i32 = arith.constant 0 : i32
    %c0_i32_0 = arith.constant 0 : i32
    %c0_i32_1 = arith.constant 0 : i32
    return %c0_i32, %c0_i32_0 : i32, i32
  }
  func.func @transform_5(%arg0: i32, %arg1: i32) -> (i32, i32) {
    %c0_i32 = arith.constant 0 : i32
    return %arg0, %arg1 : i32, i32
  }
}

module attributes {stable_mosaic.version = 11 : i64} {
  func.func @_upsample2_kernel(%arg0: i32, %arg1: i32, %arg2: memref<8x128xf32, #tpu.memory_space<vmem>>, %arg3: memref<8x128xf32, #tpu.memory_space<vmem>>, %arg4: memref<8x128xf32, #tpu.memory_space<vmem>>, %arg5: memref<128x128xbf16, #tpu.memory_space<vmem>>, %arg6: memref<128x128xbf16, #tpu.memory_space<vmem>>, %arg7: memref<8x256xf32, #tpu.memory_space<vmem>>, %arg8: memref<8x384xbf16, #tpu.memory_space<vmem>>, %arg9: memref<8x384xbf16, #tpu.memory_space<vmem>>) attributes {dimension_semantics = [#tpu.dimension_semantics<parallel>, #tpu.dimension_semantics<parallel>], iteration_bounds = array<i64: 1, 4>, scalar_prefetch = 0 : i64, scratch_operands = 2 : i64, tpu.core_type = #tpu.core_type<tc>, window_params = [{transform_indices = @transform_0, window_bounds = array<i64: 8, 128>}, {transform_indices = @transform_1, window_bounds = array<i64: 8, 128>}, {transform_indices = @transform_2, window_bounds = array<i64: 8, 128>}, {pipeline_mode = #tpu.pipeline_mode<synchronous>, transform_indices = @transform_3, window_bounds = array<i64: 128, 128>}, {pipeline_mode = #tpu.pipeline_mode<synchronous>, transform_indices = @transform_4, window_bounds = array<i64: 128, 128>}, {transform_indices = @transform_5, window_bounds = array<i64: 8, 256>}]} {
    %c0 = arith.constant 0 : index
    %c0_0 = arith.constant 0 : index
    %0 = vector.load %arg2[%c0, %c0_0] : memref<8x128xf32, #tpu.memory_space<vmem>>, vector<8x128xf32>
    %1 = arith.truncf %0 : vector<8x128xf32> to vector<8x128xbf16>
    %2 = arith.extf %1 : vector<8x128xbf16> to vector<8x128xf32>
    %3 = arith.subf %0, %2 : vector<8x128xf32>
    %4 = arith.truncf %3 : vector<8x128xf32> to vector<8x128xbf16>
    %c0_1 = arith.constant 0 : index
    %c128 = arith.constant 128 : index
    %5 = vector.load %arg8[%c0_1, %c128] : memref<8x384xbf16, #tpu.memory_space<vmem>>, vector<8x128xbf16>
    tpu.vector_store %arg8[%c0_1, %c128], %1 {strides = array<i32>} : memref<8x384xbf16, #tpu.memory_space<vmem>>, vector<8x128xbf16>,
    %c0_2 = arith.constant 0 : index
    %c128_3 = arith.constant 128 : index
    %6 = vector.load %arg9[%c0_2, %c128_3] : memref<8x384xbf16, #tpu.memory_space<vmem>>, vector<8x128xbf16>
    tpu.vector_store %arg9[%c0_2, %c128_3], %4 {strides = array<i32>} : memref<8x384xbf16, #tpu.memory_space<vmem>>, vector<8x128xbf16>,
    %c0_4 = arith.constant 0 : index
    %c0_5 = arith.constant 0 : index
    %7 = vector.load %arg3[%c0_4, %c0_5] : memref<8x128xf32, #tpu.memory_space<vmem>>, vector<8x128xf32>
    %8 = arith.truncf %7 : vector<8x128xf32> to vector<8x128xbf16>
    %9 = arith.extf %8 : vector<8x128xbf16> to vector<8x128xf32>
    %10 = arith.subf %7, %9 : vector<8x128xf32>
    %11 = arith.truncf %10 : vector<8x128xf32> to vector<8x128xbf16>
    %c0_6 = arith.constant 0 : index
    %c0_7 = arith.constant 0 : index
    %12 = vector.load %arg8[%c0_6, %c0_7] : memref<8x384xbf16, #tpu.memory_space<vmem>>, vector<8x128xbf16>
    tpu.vector_store %arg8[%c0_6, %c0_7], %8 {strides = array<i32>} : memref<8x384xbf16, #tpu.memory_space<vmem>>, vector<8x128xbf16>,
    %c0_8 = arith.constant 0 : index
    %c0_9 = arith.constant 0 : index
    %13 = vector.load %arg9[%c0_8, %c0_9] : memref<8x384xbf16, #tpu.memory_space<vmem>>, vector<8x128xbf16>
    tpu.vector_store %arg9[%c0_8, %c0_9], %11 {strides = array<i32>} : memref<8x384xbf16, #tpu.memory_space<vmem>>, vector<8x128xbf16>,
    %c0_10 = arith.constant 0 : index
    %c0_11 = arith.constant 0 : index
    %14 = vector.load %arg4[%c0_10, %c0_11] : memref<8x128xf32, #tpu.memory_space<vmem>>, vector<8x128xf32>
    %15 = arith.truncf %14 : vector<8x128xf32> to vector<8x128xbf16>
    %16 = arith.extf %15 : vector<8x128xbf16> to vector<8x128xf32>
    %17 = arith.subf %14, %16 : vector<8x128xf32>
    %18 = arith.truncf %17 : vector<8x128xf32> to vector<8x128xbf16>
    %c0_12 = arith.constant 0 : index
    %c256 = arith.constant 256 : index
    %19 = vector.load %arg8[%c0_12, %c256] : memref<8x384xbf16, #tpu.memory_space<vmem>>, vector<8x128xbf16>
    tpu.vector_store %arg8[%c0_12, %c256], %15 {strides = array<i32>} : memref<8x384xbf16, #tpu.memory_space<vmem>>, vector<8x128xbf16>,
    %c0_13 = arith.constant 0 : index
    %c256_14 = arith.constant 256 : index
    %20 = vector.load %arg9[%c0_13, %c256_14] : memref<8x384xbf16, #tpu.memory_space<vmem>>, vector<8x128xbf16>
    tpu.vector_store %arg9[%c0_13, %c256_14], %18 {strides = array<i32>} : memref<8x384xbf16, #tpu.memory_space<vmem>>, vector<8x128xbf16>,
    %cst = arith.constant 0.000000e+00 : bf16
    %21 = vector.broadcast %cst : bf16 to vector<8x128xbf16>
    %c0_i32 = arith.constant 0 : i32
    %22 = arith.cmpi eq, %arg1, %c0_i32 : i32
    %23 = arith.extui %22 : i1 to i32
    %c0_i32_15 = arith.constant 0 : i32
    %24 = arith.cmpi ne, %23, %c0_i32_15 : i32
    scf.if %24 {
      %c0_37 = arith.constant 0 : index
      %c0_38 = arith.constant 0 : index
      %46 = vector.load %arg8[%c0_37, %c0_38] : memref<8x384xbf16, #tpu.memory_space<vmem>>, vector<8x128xbf16>
      tpu.vector_store %arg8[%c0_37, %c0_38], %21 {strides = array<i32>} : memref<8x384xbf16, #tpu.memory_space<vmem>>, vector<8x128xbf16>,
      %c0_39 = arith.constant 0 : index
      %c0_40 = arith.constant 0 : index
      %47 = vector.load %arg9[%c0_39, %c0_40] : memref<8x384xbf16, #tpu.memory_space<vmem>>, vector<8x128xbf16>
      tpu.vector_store %arg9[%c0_39, %c0_40], %21 {strides = array<i32>} : memref<8x384xbf16, #tpu.memory_space<vmem>>, vector<8x128xbf16>,
    } else {
    }
    %c3_i32 = arith.constant 3 : i32
    %25 = arith.cmpi eq, %arg1, %c3_i32 : i32
    %26 = arith.extui %25 : i1 to i32
    %c0_i32_16 = arith.constant 0 : i32
    %27 = arith.cmpi ne, %26, %c0_i32_16 : i32
    scf.if %27 {
      %c0_37 = arith.constant 0 : index
      %c256_38 = arith.constant 256 : index
      %46 = vector.load %arg8[%c0_37, %c256_38] : memref<8x384xbf16, #tpu.memory_space<vmem>>, vector<8x128xbf16>
      tpu.vector_store %arg8[%c0_37, %c256_38], %21 {strides = array<i32>} : memref<8x384xbf16, #tpu.memory_space<vmem>>, vector<8x128xbf16>,
      %c0_39 = arith.constant 0 : index
      %c256_40 = arith.constant 256 : index
      %47 = vector.load %arg9[%c0_39, %c256_40] : memref<8x384xbf16, #tpu.memory_space<vmem>>, vector<8x128xbf16>
      tpu.vector_store %arg9[%c0_39, %c256_40], %21 {strides = array<i32>} : memref<8x384xbf16, #tpu.memory_space<vmem>>, vector<8x128xbf16>,
    } else {
    }
    %c0_17 = arith.constant 0 : index
    %c0_18 = arith.constant 0 : index
    %28 = vector.load %arg5[%c0_17, %c0_18] : memref<128x128xbf16, #tpu.memory_space<vmem>>, vector<128x128xbf16>
    %c0_19 = arith.constant 0 : index
    %c0_20 = arith.constant 0 : index
    %29 = vector.load %arg6[%c0_19, %c0_20] : memref<128x128xbf16, #tpu.memory_space<vmem>>, vector<128x128xbf16>
    %c0_21 = arith.constant 0 : index
    %c121 = arith.constant 121 : index
    %30 = vector.load %arg8[%c0_21, %c121] : memref<8x384xbf16, #tpu.memory_space<vmem>>, vector<8x128xbf16>
    %c0_22 = arith.constant 0 : index
    %c121_23 = arith.constant 121 : index
    %31 = vector.load %arg9[%c0_22, %c121_23] : memref<8x384xbf16, #tpu.memory_space<vmem>>, vector<8x128xbf16>
    %cst_24 = arith.constant dense<0.000000e+00> : vector<8x128xf32>
    %32 = tpu.matmul %30, %28, %cst_24 {dimension_numbers = #tpu.dot_dimension_numbers<[1], [0], [0], [1], [0, 0, 1, 1], [], []>} : vector<8x128xbf16>, vector<128x128xbf16>, vector<8x128xf32> -> vector<8x128xf32>
    %cst_25 = arith.constant dense<0.000000e+00> : vector<8x128xf32>
    %33 = tpu.matmul %30, %29, %cst_25 {dimension_numbers = #tpu.dot_dimension_numbers<[1], [0], [0], [1], [0, 0, 1, 1], [], []>} : vector<8x128xbf16>, vector<128x128xbf16>, vector<8x128xf32> -> vector<8x128xf32>
    %34 = arith.addf %32, %33 : vector<8x128xf32>
    %cst_26 = arith.constant dense<0.000000e+00> : vector<8x128xf32>
    %35 = tpu.matmul %31, %28, %cst_26 {dimension_numbers = #tpu.dot_dimension_numbers<[1], [0], [0], [1], [0, 0, 1, 1], [], []>} : vector<8x128xbf16>, vector<128x128xbf16>, vector<8x128xf32> -> vector<8x128xf32>
    %36 = arith.addf %34, %35 : vector<8x128xf32>
    %c0_27 = arith.constant 0 : index
    %c0_28 = arith.constant 0 : index
    %37 = vector.load %arg7[%c0_27, %c0_28] : memref<8x256xf32, #tpu.memory_space<vmem>>, vector<8x128xf32>
    tpu.vector_store %arg7[%c0_27, %c0_28], %36 {strides = array<i32>} : memref<8x256xf32, #tpu.memory_space<vmem>>, vector<8x128xf32>,
    %c0_29 = arith.constant 0 : index
    %c185 = arith.constant 185 : index
    %38 = vector.load %arg8[%c0_29, %c185] : memref<8x384xbf16, #tpu.memory_space<vmem>>, vector<8x128xbf16>
    %c0_30 = arith.constant 0 : index
    %c185_31 = arith.constant 185 : index
    %39 = vector.load %arg9[%c0_30, %c185_31] : memref<8x384xbf16, #tpu.memory_space<vmem>>, vector<8x128xbf16>
    %cst_32 = arith.constant dense<0.000000e+00> : vector<8x128xf32>
    %40 = tpu.matmul %38, %28, %cst_32 {dimension_numbers = #tpu.dot_dimension_numbers<[1], [0], [0], [1], [0, 0, 1, 1], [], []>} : vector<8x128xbf16>, vector<128x128xbf16>, vector<8x128xf32> -> vector<8x128xf32>
    %cst_33 = arith.constant dense<0.000000e+00> : vector<8x128xf32>
    %41 = tpu.matmul %38, %29, %cst_33 {dimension_numbers = #tpu.dot_dimension_numbers<[1], [0], [0], [1], [0, 0, 1, 1], [], []>} : vector<8x128xbf16>, vector<128x128xbf16>, vector<8x128xf32> -> vector<8x128xf32>
    %42 = arith.addf %40, %41 : vector<8x128xf32>
    %cst_34 = arith.constant dense<0.000000e+00> : vector<8x128xf32>
    %43 = tpu.matmul %39, %28, %cst_34 {dimension_numbers = #tpu.dot_dimension_numbers<[1], [0], [0], [1], [0, 0, 1, 1], [], []>} : vector<8x128xbf16>, vector<128x128xbf16>, vector<8x128xf32> -> vector<8x128xf32>
    %44 = arith.addf %42, %43 : vector<8x128xf32>
    %c0_35 = arith.constant 0 : index
    %c128_36 = arith.constant 128 : index
    %45 = vector.load %arg7[%c0_35, %c128_36] : memref<8x256xf32, #tpu.memory_space<vmem>>, vector<8x128xf32>
    tpu.vector_store %arg7[%c0_35, %c128_36], %44 {strides = array<i32>} : memref<8x256xf32, #tpu.memory_space<vmem>>, vector<8x128xf32>,
    return
  }
  func.func @transform_0(%arg0: i32, %arg1: i32) -> (i32, i32) {
    %c0_i32 = arith.constant 0 : i32
    return %arg0, %arg1 : i32, i32
  }
  func.func @transform_1(%arg0: i32, %arg1: i32) -> (i32, i32) {
    %c1_i32 = arith.constant 1 : i32
    %0 = arith.muli %arg1, %c1_i32 : i32
    %c1_i32_0 = arith.constant 1 : i32
    %1 = arith.subi %0, %c1_i32_0 : i32
    %c0_i32 = arith.constant 0 : i32
    %2 = arith.maxsi %1, %c0_i32 : i32
    %c0_i32_1 = arith.constant 0 : i32
    return %arg0, %2 : i32, i32
  }
  func.func @transform_2(%arg0: i32, %arg1: i32) -> (i32, i32) {
    %c1_i32 = arith.constant 1 : i32
    %0 = arith.muli %arg1, %c1_i32 : i32
    %c1_i32_0 = arith.constant 1 : i32
    %1 = arith.addi %0, %c1_i32_0 : i32
    %c3_i32 = arith.constant 3 : i32
    %2 = arith.minsi %1, %c3_i32 : i32
    %c0_i32 = arith.constant 0 : i32
    return %arg0, %2 : i32, i32
  }
  func.func @transform_3(%arg0: i32, %arg1: i32) -> (i32, i32) {
    %c0_i32 = arith.constant 0 : i32
    %c0_i32_0 = arith.constant 0 : i32
    %c0_i32_1 = arith.constant 0 : i32
    return %c0_i32, %c0_i32_0 : i32, i32
  }
  func.func @transform_4(%arg0: i32, %arg1: i32) -> (i32, i32) {
    %c0_i32 = arith.constant 0 : i32
    %c0_i32_0 = arith.constant 0 : i32
    %c0_i32_1 = arith.constant 0 : i32
    return %c0_i32, %c0_i32_0 : i32, i32
  }
  func.func @transform_5(%arg0: i32, %arg1: i32) -> (i32, i32) {
    %c0_i32 = arith.constant 0 : i32
    return %arg0, %arg1 : i32, i32
  }
}

</mosaic_0001>

<llo_original>
// kernel: sampling_base_forward.2
$region0: #{sampling_base_forward.2}
  #allocation0 [shape = 'u32[]', space=smem, size = 0x4, offset = 0x4, fixed_abs, tag = 'smem constant byte address 0x4 - core index']
  #allocation1 [shape = 'u32[144,128]{1,0:T(1,128)}', space=vmem, size = 0x12000, scoped, tag = 'internal scratch']
  #allocation2 [shape = 'bf16[8,384]{1,0:T(8,128)(2,1)}', space=vmem, size = 0x1800, scoped, tag = 'scratch operand']
  #allocation3 [shape = 'bf16[8,384]{1,0:T(8,128)(2,1)}', space=vmem, size = 0x1800, scoped, tag = 'scratch operand']
  %s0 = inlined_call_operand.vmem [shape: f32[8,256], index: 0, kind: input, shape index: {}, may-alias: {0,1,2}]
  %s1 = inlined_call_operand.vmem [shape: f32[8,256], index: 1, kind: input, shape index: {}, may-alias: {0,1,2}]
  %s2 = inlined_call_operand.vmem [shape: f32[8,256], index: 2, kind: input, shape index: {}, may-alias: {0,1,2}]
  %s3 = inlined_call_operand.hbm [shape: bf16[128,128], index: 3, kind: input, shape index: {}]
  %s4 = inlined_call_operand.vmem [shape: bf16[128,128], index: 4, kind: input, shape index: {}]
  %s5 = inlined_call_operand.vmem [shape: f32[8,512], index: 5, kind: output, shape index: {}]
  %s6 = sld [smem:[#allocation0]]
  $region65: #{sampling_base_forward.2} parent=0
    _
  %s8 = ssub.s32 1, %s6
  %s9 = scalar_select 0, %s8, %s6
  $region1: #{sampling_base_forward.2} parent=0
    #allocation4 [shape = 'u8[32768]{0}', space=vmem, size = 0x8000, scoped, tag = 'input window, operand 3, single buffered']
    #allocation5 [shape = 's32[2]{0}', space=sflag, size = 0x8, scoped, tag = 'scoped memory for sampling_base_forward.2']
    %10 = vsyncpa [#allocation5], 0
    loop: start=0, step=1, limit=4
    $region2: #{sampling_base_forward.2} parent=1 // loop_pre_header
      _
    $region3: #{sampling_base_forward.2} parent=1 // loop_header
      %s12 = sphi 0, %s16
      %p13 = scmp.ge.s32.totalorder %s12, 4
      %s19 = sphi 0, %s31
      %s20 = sphi 0, %s27
      %s21 = sphi 0, %s19
      %s22 = sphi 0, %s20
      %s23 = sphi 0, %s21
      %s24 = sphi 0, %s22
      %s36 = sphi 0, %s38
      %s39 = sphi 0, %s36
      %s40 = sphi 0, %s39
      %s56 = sphi 0, %s40
      %s70 = sphi 0, %s72
      %s73 = sphi 0, %s70
      %s74 = sphi 0, %s73
      %s90 = sphi 0, %s74
      %s104 = sphi 0, %s106
      %s107 = sphi 0, %s104
      %s108 = sphi 0, %s107
      %s124 = sphi 0, %s108
      %s128 = sphi 0, %s128
      %s130 = sphi 0, %s128
      %s131 = sphi 0, %s130
      %s145 = sphi 0, %s131
      %s149 = sphi 0, %s149
      %s151 = sphi 0, %s149
      %s152 = sphi 0, %s151
      %s166 = sphi 0, %s152
      %s174 = sphi 0, %s176
      %s177 = sphi 0, %s174
      %s178 = sphi 0, %s177
      %s194 = sphi 0, %s178
    $region4: #{sampling_base_forward.2} parent=1 // loop_header_branch
      %15 = sbr.rel (%p13) target = $region8
    $region5: #{sampling_base_forward.2} parent=1 // loop_body
      %s17 = ssub.s32 %s12, 1
      %s18 = ssub.s32 %s12, 2
      %s25 = sadd.s32 1, %s20
      %p26 = scmp.ge.s32.totalorder %s25, 2
      %s27 = scalar_select %p26, 0, %s25
      %s28 = sadd.s32 1, %s19
      %s29 = scalar_select %p26, %s28, %s19
      %p30 = scmp.ge.s32.totalorder %s29, 1
      %s31 = scalar_select %p30, 0, %s29
      %s32 = ssub.s32 %s19, %s31
      %s33 = ssub.s32 %s20, %s27
      %s34 = sor.u32 %s32, %s33
      %p35 = scmp.eq.s32.totalorder %s34, 0
      %s37 = sadd.s32 %s36, 1
      %s38 = scalar_select %p35, %s36, %s37
      %p41 = pneg %p35
      %p42 = scmp.eq.s32.totalorder %s12, 1
      %p43 = por %p41, %p42
      %p44 = scmp.ne.s32.totalorder %s36, %s39
      %p45 = scmp.eq.s32.totalorder %s12, 0
      %p46 = por %p44, %p45
      %p47 = scmp.ne.s32.totalorder %s36, %s39
      %p48 = scmp.eq.s32.totalorder %s17, 1
      %p49 = por %p47, %p48
      %p50 = scmp.ne.s32.totalorder %s39, %s40
      %p51 = scmp.eq.s32.totalorder %s17, 0
      %p52 = por %p50, %p51
      %p53 = scmp.ne.s32.totalorder %s39, %s40
      %p54 = scmp.eq.s32.totalorder %s18, 1
      %p55 = por %p53, %p54
      %p57 = scmp.ne.s32.totalorder %s40, %s56
      %p58 = scmp.eq.s32.totalorder %s18, 0
      %p59 = por %p57, %p58
      %s60 = ssub.s32 %s20, 1
      %p61 = scmp.gt.s32.totalorder %s60, 0
      %s62 = scalar_select %p61, %s60, 0
      %s63 = ssub.s32 %s27, 1
      %p64 = scmp.gt.s32.totalorder %s63, 0
      %s65 = scalar_select %p64, %s63, 0
      %s66 = ssub.s32 %s19, %s31
      %s67 = ssub.s32 %s62, %s65
      %s68 = sor.u32 %s66, %s67
      %p69 = scmp.eq.s32.totalorder %s68, 0
      %s71 = sadd.s32 %s70, 1
      %s72 = scalar_select %p69, %s70, %s71
      %p75 = pneg %p69
      %p76 = scmp.eq.s32.totalorder %s12, 1
      %p77 = por %p75, %p76
      %p78 = scmp.ne.s32.totalorder %s70, %s73
      %p79 = scmp.eq.s32.totalorder %s12, 0
      %p80 = por %p78, %p79
      %p81 = scmp.ne.s32.totalorder %s70, %s73
      %p82 = scmp.eq.s32.totalorder %s17, 1
      %p83 = por %p81, %p82
      %p84 = scmp.ne.s32.totalorder %s73, %s74
      %p85 = scmp.eq.s32.totalorder %s17, 0
      %p86 = por %p84, %p85
      %p87 = scmp.ne.s32.totalorder %s73, %s74
      %p88 = scmp.eq.s32.totalorder %s18, 1
      %p89 = por %p87, %p88
      %p91 = scmp.ne.s32.totalorder %s74, %s90
      %p92 = scmp.eq.s32.totalorder %s18, 0
      %p93 = por %p91, %p92
      %s94 = sadd.s32 %s20, 1
      %p95 = scmp.lt.s32.totalorder %s94, 1
      %s96 = scalar_select %p95, %s94, 1
      %s97 = sadd.s32 %s27, 1
      %p98 = scmp.lt.s32.totalorder %s97, 1
      %s99 = scalar_select %p98, %s97, 1
      %s100 = ssub.s32 %s19, %s31
      %s101 = ssub.s32 %s96, %s99
      %s102 = sor.u32 %s100, %s101
      %p103 = scmp.eq.s32.totalorder %s102, 0
      %s105 = sadd.s32 %s104, 1
      %s106 = scalar_select %p103, %s104, %s105
      %p109 = pneg %p103
      %p110 = scmp.eq.s32.totalorder %s12, 1
      %p111 = por %p109, %p110
      %p112 = scmp.ne.s32.totalorder %s104, %s107
      %p113 = scmp.eq.s32.totalorder %s12, 0
      %p114 = por %p112, %p113
      %p115 = scmp.ne.s32.totalorder %s104, %s107
      %p116 = scmp.eq.s32.totalorder %s17, 1
      %p117 = por %p115, %p116
      %p118 = scmp.ne.s32.totalorder %s107, %s108
      %p119 = scmp.eq.s32.totalorder %s17, 0
      %p120 = por %p118, %p119
      %p121 = scmp.ne.s32.totalorder %s107, %s108
      %p122 = scmp.eq.s32.totalorder %s18, 1
      %p123 = por %p121, %p122
      %p125 = scmp.ne.s32.totalorder %s108, %s124
      %p126 = scmp.eq.s32.totalorder %s18, 0
      %p127 = por %p125, %p126
      %s129 = sadd.s32 %s128, 1
      %p132 = scmp.eq.s32.totalorder %s12, 1
      %p133 = scmp.ne.s32.totalorder %s128, %s130
      %p134 = scmp.eq.s32.totalorder %s12, 0
      %p135 = por %p133, %p134
      %p136 = scmp.ne.s32.totalorder %s128, %s130
      %p137 = scmp.eq.s32.totalorder %s17, 1
      %p138 = por %p136, %p137
      %p139 = scmp.ne.s32.totalorder %s130, %s131
      %p140 = scmp.eq.s32.totalorder %s17, 0
      %p141 = por %p139, %p140
      %p142 = scmp.ne.s32.totalorder %s130, %s131
      %p143 = scmp.eq.s32.totalorder %s18, 1
      %p144 = por %p142, %p143
      %p146 = scmp.ne.s32.totalorder %s131, %s145
      %p147 = scmp.eq.s32.totalorder %s18, 0
      %p148 = por %p146, %p147
      %s150 = sadd.s32 %s149, 1
      %p153 = scmp.eq.s32.totalorder %s12, 1
      %p154 = scmp.ne.s32.totalorder %s149, %s151
      %p155 = scmp.eq.s32.totalorder %s12, 0
      %p156 = por %p154, %p155
      %p157 = scmp.ne.s32.totalorder %s149, %s151
      %p158 = scmp.eq.s32.totalorder %s17, 1
      %p159 = por %p157, %p158
      %p160 = scmp.ne.s32.totalorder %s151, %s152
      %p161 = scmp.eq.s32.totalorder %s17, 0
      %p162 = por %p160, %p161
      %p163 = scmp.ne.s32.totalorder %s151, %s152
      %p164 = scmp.eq.s32.totalorder %s18, 1
      %p165 = por %p163, %p164
      %p167 = scmp.ne.s32.totalorder %s152, %s166
      %p168 = scmp.eq.s32.totalorder %s18, 0
      %p169 = por %p167, %p168
      %s170 = ssub.s32 %s19, %s31
      %s171 = ssub.s32 %s20, %s27
      %s172 = sor.u32 %s170, %s171
      %p173 = scmp.eq.s32.totalorder %s172, 0
      %s175 = sadd.s32 %s174, 1
      %s176 = scalar_select %p173, %s174, %s175
      %p179 = pneg %p173
      %p180 = scmp.eq.s32.totalorder %s12, 1
      %p181 = por %p179, %p180
      %p182 = scmp.ne.s32.totalorder %s174, %s177
      %p183 = scmp.eq.s32.totalorder %s12, 0
      %p184 = por %p182, %p183
      %p185 = scmp.ne.s32.totalorder %s174, %s177
      %p186 = scmp.eq.s32.totalorder %s17, 1
      %p187 = por %p185, %p186
      %p188 = scmp.ne.s32.totalorder %s177, %s178
      %p189 = scmp.eq.s32.totalorder %s17, 0
      %p190 = por %p188, %p189
      %p191 = scmp.ne.s32.totalorder %s177, %s178
      %p192 = scmp.eq.s32.totalorder %s18, 1
      %p193 = por %p191, %p192
      %p195 = scmp.ne.s32.totalorder %s178, %s194
      %p196 = scmp.eq.s32.totalorder %s18, 0
      %p197 = por %p195, %p196
      %p198 = scmp.le.s32.totalorder 1, %s12
      %p199 = scmp.lt.s32.totalorder %s12, 3
      %p200 = pnand %p198, %p199
      %p201 = pneg %p200
      // Predicated region
      $region9: #{sampling_base_forward.2} parent=5 // pred_check
        _
      $region10: #{sampling_base_forward.2} parent=5 // pred_check_branch
        %203 = sbr.rel (%p200) target = $region12
      $region11: #{sampling_base_forward.2} parent=5 // pred_region
        %s204 = ssub.s32 %s12, 1
        // Predicated region
        $region13: #{sampling_base_forward.2} parent=11 // pred_check
          %p205 = pneg %p141
        $region14: #{sampling_base_forward.2} parent=11 // pred_check_branch
          %207 = sbr.rel (%p205) target = $region16
        $region15: #{sampling_base_forward.2} parent=11 // pred_region
          %s209 = ssub.s32 1024, 1024
          %210 = vsyncadd [#allocation5], %s209
          %s211 = sshll.u32 [#allocation4], 4
          %s212 = int_to_ptr.vmem [resolvable:$true] %s211
          %217 = dma.hbm_to_vmem [thread:$0]  %s3, 1024, %s212, [#allocation5], 64, 64, 4
        $region16: #{sampling_base_forward.2} parent=11 // pred_fallthru
          _
        // Predicated region
        $region17: #{sampling_base_forward.2} parent=11 // pred_check
          %p218 = pneg %p162
        $region18: #{sampling_base_forward.2} parent=11 // pred_check_branch
          %220 = sbr.rel (%p218) target = $region20
        $region19: #{sampling_base_forward.2} parent=11 // pred_region
          _
        $region20: #{sampling_base_forward.2} parent=11 // pred_fallthru
          _
      $region12: #{sampling_base_forward.2} parent=5 // pred_fallthru
        _
      %p221 = scmp.lt.s32.totalorder %s12, 2
      // Predicated region
      $region21: #{sampling_base_forward.2} parent=5 // pred_check
        %p222 = pneg %p221
      $region22: #{sampling_base_forward.2} parent=5 // pred_check_branch
        %224 = sbr.rel (%p222) target = $region24
      $region23: #{sampling_base_forward.2} parent=5 // pred_region
        // Predicated region
        $region25: #{sampling_base_forward.2} parent=23 // pred_check
          %p225 = pneg %p46
        $region26: #{sampling_base_forward.2} parent=23 // pred_check_branch
          %227 = sbr.rel (%p225) target = $region28
        $region27: #{sampling_base_forward.2} parent=23 // pred_region
          %p228 = scmp.lt.s32.totalorder %s19, 0
          %s229 = scalar_select %p228, %s19, 0
          %p230 = scmp.lt.s32.totalorder %s20, 1
          %s231 = scalar_select %p230, %s20, 1
          %s232 = smul.addr %s229, 2
          %s233 = sadd.s32 %s231, %s232
          %s234 = smul.addr %s233, 8
          %s235 = scalar_lea.vmem %s0, %s234
        $region28: #{sampling_base_forward.2} parent=23 // pred_fallthru
          _
        // Predicated region
        $region29: #{sampling_base_forward.2} parent=23 // pred_check
          %p236 = pneg %p80
        $region30: #{sampling_base_forward.2} parent=23 // pred_check_branch
          %238 = sbr.rel (%p236) target = $region32
        $region31: #{sampling_base_forward.2} parent=23 // pred_region
          %s239 = ssub.s32 %s20, 1
          %p240 = scmp.gt.s32.totalorder %s239, 0
          %s241 = scalar_select %p240, %s239, 0
          %p242 = scmp.lt.s32.totalorder %s19, 0
          %s243 = scalar_select %p242, %s19, 0
          %p244 = scmp.lt.s32.totalorder %s241, 1
          %s245 = scalar_select %p244, %s241, 1
          %s246 = smul.addr %s243, 2
          %s247 = sadd.s32 %s245, %s246
          %s248 = smul.addr %s247, 8
          %s249 = scalar_lea.vmem %s1, %s248
          %s250 = ssub.s32 %s20, 1
          %p251 = scmp.gt.s32.totalorder %s250, 0
          %s252 = scalar_select %p251, %s250, 0
        $region32: #{sampling_base_forward.2} parent=23 // pred_fallthru
          _
        // Predicated region
        $region33: #{sampling_base_forward.2} parent=23 // pred_check
          %p253 = pneg %p114
        $region34: #{sampling_base_forward.2} parent=23 // pred_check_branch
          %255 = sbr.rel (%p253) target = $region36
        $region35: #{sampling_base_forward.2} parent=23 // pred_region
          %s256 = sadd.s32 %s20, 1
          %p257 = scmp.lt.s32.totalorder %s256, 1
          %s258 = scalar_select %p257, %s256, 1
          %p259 = scmp.lt.s32.totalorder %s19, 0
          %s260 = scalar_select %p259, %s19, 0
          %p261 = scmp.lt.s32.totalorder %s258, 1
          %s262 = scalar_select %p261, %s258, 1
          %s263 = smul.addr %s260, 2
          %s264 = sadd.s32 %s262, %s263
          %s265 = smul.addr %s264, 8
          %s266 = scalar_lea.vmem %s2, %s265
          %s267 = sadd.s32 %s20, 1
          %p268 = scmp.lt.s32.totalorder %s267, 1
          %s269 = scalar_select %p268, %s267, 1
        $region36: #{sampling_base_forward.2} parent=23 // pred_fallthru
          _
      $region24: #{sampling_base_forward.2} parent=5 // pred_fallthru
        _
      %p270 = scmp.le.s32.totalorder 1, %s12
      %p271 = scmp.lt.s32.totalorder %s12, 3
      %p272 = pnand %p270, %p271
      %p273 = pneg %p272
      // Predicated region
      $region37: #{sampling_base_forward.2} parent=5 // pred_check
        _
      $region38: #{sampling_base_forward.2} parent=5 // pred_check_branch
        %275 = sbr.rel (%p272) target = $region40
      $region39: #{sampling_base_forward.2} parent=5 // pred_region
        %s276 = ssub.s32 %s12, 1
        // Predicated region
        $region41: #{sampling_base_forward.2} parent=39 // pred_check
          %p277 = pneg %p141
        $region42: #{sampling_base_forward.2} parent=39 // pred_check_branch
          %279 = sbr.rel (%p277) target = $region44
        $region43: #{sampling_base_forward.2} parent=39 // pred_region
          %280 = dma.done [#allocation5], 1024
        $region44: #{sampling_base_forward.2} parent=39 // pred_fallthru
          _
        %p281 = scmp.lt.s32.totalorder %s21, 0
        %s282 = scalar_select %p281, %s21, 0
        %p283 = scmp.lt.s32.totalorder %s22, 1
        %s284 = scalar_select %p283, %s22, 1
        %s285 = smul.addr %s282, 2
        %s286 = sadd.s32 %s284, %s285
        %s287 = smul.addr %s286, 8
        %s288 = scalar_lea.vmem %s0, %s287
        %p289 = pneg %p52
        %p290 = pneg %p49
        %s291 = ssub.s32 %s22, 1
        %p292 = scmp.gt.s32.totalorder %s291, 0
        %s293 = scalar_select %p292, %s291, 0
        %p294 = scmp.lt.s32.totalorder %s21, 0
        %s295 = scalar_select %p294, %s21, 0
        %p296 = scmp.lt.s32.totalorder %s293, 1
        %s297 = scalar_select %p296, %s293, 1
        %s298 = smul.addr %s295, 2
        %s299 = sadd.s32 %s297, %s298
        %s300 = smul.addr %s299, 8
        %s301 = scalar_lea.vmem %s1, %s300
        %p302 = pneg %p86
        %p303 = pneg %p83
        %s304 = sadd.s32 %s22, 1
        %p305 = scmp.lt.s32.totalorder %s304, 1
        %s306 = scalar_select %p305, %s304, 1
        %p307 = scmp.lt.s32.totalorder %s21, 0
        %s308 = scalar_select %p307, %s21, 0
        %p309 = scmp.lt.s32.totalorder %s306, 1
        %s310 = scalar_select %p309, %s306, 1
        %s311 = smul.addr %s308, 2
        %s312 = sadd.s32 %s310, %s311
        %s313 = smul.addr %s312, 8
        %s314 = scalar_lea.vmem %s2, %s313
        %p315 = pneg %p120
        %p316 = pneg %p117
        %p317 = pneg %p141
        %p318 = pneg %p138
        %p319 = pneg %p162
        %p320 = pneg %p159
        %p321 = pneg %p190
        %p322 = pneg %p187
        %s323 = smul.u32 2, %s22
        %p324 = scmp.lt.s32.totalorder %s21, 0
        %s325 = scalar_select %p324, %s21, 0
        %p326 = scmp.lt.s32.totalorder %s323, 3
        %s327 = scalar_select %p326, %s323, 3
        %s328 = smul.addr %s325, 4
        %s329 = sadd.s32 %s327, %s328
        %s330 = smul.addr %s329, 8
        %s331 = scalar_lea.vmem %s5, %s330
        %p332 = scmp.lt.s32.totalorder %s21, 0
        %s333 = scalar_select %p332, %s21, 0
        %p334 = scmp.lt.s32.totalorder %s22, 1
        %s335 = scalar_select %p334, %s22, 1
        %s336 = smul.addr %s333, 2
        %s337 = sadd.s32 %s335, %s336
        %s338 = smul.addr %s337, 8
        %s339 = scalar_lea.vmem %s0, %s338
        %s340 = ssub.s32 %s22, 1
        %p341 = scmp.gt.s32.totalorder %s340, 0
        %s342 = scalar_select %p341, %s340, 0
        %p343 = scmp.lt.s32.totalorder %s21, 0
        %s344 = scalar_select %p343, %s21, 0
        %p345 = scmp.lt.s32.totalorder %s342, 1
        %s346 = scalar_select %p345, %s342, 1
        %s347 = smul.addr %s344, 2
        %s348 = sadd.s32 %s346, %s347
        %s349 = smul.addr %s348, 8
        %s350 = scalar_lea.vmem %s1, %s349
        %s351 = ssub.s32 %s22, 1
        %p352 = scmp.gt.s32.totalorder %s351, 0
        %s353 = scalar_select %p352, %s351, 0
        %s354 = sadd.s32 %s22, 1
        %p355 = scmp.lt.s32.totalorder %s354, 1
        %s356 = scalar_select %p355, %s354, 1
        %p357 = scmp.lt.s32.totalorder %s21, 0
        %s358 = scalar_select %p357, %s21, 0
        %p359 = scmp.lt.s32.totalorder %s356, 1
        %s360 = scalar_select %p359, %s356, 1
        %s361 = smul.addr %s358, 2
        %s362 = sadd.s32 %s360, %s361
        %s363 = smul.addr %s362, 8
        %s364 = scalar_lea.vmem %s2, %s363
        %s365 = sadd.s32 %s22, 1
        %p366 = scmp.lt.s32.totalorder %s365, 1
        %s367 = scalar_select %p366, %s365, 1
        %s368 = smul.u32 2, %s22
        %p369 = scmp.lt.s32.totalorder %s21, 0
        %s370 = scalar_select %p369, %s21, 0
        %p371 = scmp.lt.s32.totalorder %s368, 3
        %s372 = scalar_select %p371, %s368, 3
        %s373 = smul.addr %s370, 4
        %s374 = sadd.s32 %s372, %s373
        %s375 = smul.addr %s374, 8
        %s376 = scalar_lea.vmem %s5, %s375
        %s377 = smul.u32 2, %s22
        %v379 = vld [vmem:[%s339] sm:$0xff]
        %v380 = vpack.c.bf16 %v379, %v379
        %v381 = vunpack.c.l.bf16 %v380
        %v382 = vsub.f32 %v379, %v381
        %v383 = vpack.c.bf16 %v382, %v382
        %384 = vst [vmem:[#allocation2 + $0x4] sm:$0xf] %v380
        %385 = vst [vmem:[#allocation3 + $0x4] sm:$0xf] %v383
        %v386 = vld [vmem:[%s350] sm:$0xff]
        %v387 = vpack.c.bf16 %v386, %v386
        %v388 = vunpack.c.l.bf16 %v387
        %v389 = vsub.f32 %v386, %v388
        %v390 = vpack.c.bf16 %v389, %v389
        %391 = vst [vmem:[#allocation2] sm:$0xf] %v387
        %392 = vst [vmem:[#allocation3] sm:$0xf] %v390
        %v393 = vld [vmem:[%s364] sm:$0xff]
        %v394 = vpack.c.bf16 %v393, %v393
        %v395 = vunpack.c.l.bf16 %v394
        %v396 = vsub.f32 %v393, %v395
        %v397 = vpack.c.bf16 %v396, %v396
        %398 = vst [vmem:[#allocation2 + $0x8] sm:$0xf] %v394
        %399 = vst [vmem:[#allocation3 + $0x8] sm:$0xf] %v397
        %p400 = scmp.eq.s32.totalorder %s22, 0
        // Predicated region
        $region45: #{sampling_base_forward.2} parent=39 // pred_check
          %p401 = pneg %p400
        $region46: #{sampling_base_forward.2} parent=39 // pred_check_branch
          %403 = sbr.rel (%p401) target = $region48
        $region47: #{sampling_base_forward.2} parent=39 // pred_region
          %404 = vst [vmem:[#allocation2] sm:$0xf] 0
          %405 = vst [vmem:[#allocation3] sm:$0xf] 0
        $region48: #{sampling_base_forward.2} parent=39 // pred_fallthru
          _
        %p406 = scmp.eq.s32.totalorder %s22, 1
        // Predicated region
        $region49: #{sampling_base_forward.2} parent=39 // pred_check
          %p407 = pneg %p406
        $region50: #{sampling_base_forward.2} parent=39 // pred_check_branch
          %409 = sbr.rel (%p407) target = $region52
        $region51: #{sampling_base_forward.2} parent=39 // pred_region
          %410 = vst [vmem:[#allocation2 + $0x8] sm:$0xf] 0
          %411 = vst [vmem:[#allocation3 + $0x8] sm:$0xf] 0
        $region52: #{sampling_base_forward.2} parent=39 // pred_fallthru
          _
        %v412 = vld [vmem:[#allocation4] sm:$0xf]
        %v413 = vld [vmem:[#allocation4 + $0x4] sm:$0xf]
        %v414 = vld [vmem:[#allocation4 + $0x8] sm:$0xf]
        %v415 = vld [vmem:[#allocation4 + $0xc] sm:$0xf]
        %v416 = vld [vmem:[#allocation4 + $0x10] sm:$0xf]
        %v417 = vld [vmem:[#allocation4 + $0x14] sm:$0xf]
        %v418 = vld [vmem:[#allocation4 + $0x18] sm:$0xf]
        %v419 = vld [vmem:[#allocation4 + $0x1c] sm:$0xf]
        %v420 = vld [vmem:[#allocation4 + $0x20] sm:$0xf]
        %v421 = vld [vmem:[#allocation4 + $0x24] sm:$0xf]
        %v422 = vld [vmem:[#allocation4 + $0x28] sm:$0xf]
        %v423 = vld [vmem:[#allocation4 + $0x2c] sm:$0xf]
        %v424 = vld [vmem:[#allocation4 + $0x30] sm:$0xf]
        %v425 = vld [vmem:[#allocation4 + $0x34] sm:$0xf]
        %v426 = vld [vmem:[#allocation4 + $0x38] sm:$0xf]
        %v427 = vld [vmem:[#allocation4 + $0x3c] sm:$0xf]
        %v428 = vld [vmem:[%s4] sm:$0xf]
        %v429 = vld [vmem:[%s4 + $0x4] sm:$0xf]
        %v430 = vld [vmem:[%s4 + $0x8] sm:$0xf]
        %v431 = vld [vmem:[%s4 + $0xc] sm:$0xf]
        %v432 = vld [vmem:[%s4 + $0x10] sm:$0xf]
        %v433 = vld [vmem:[%s4 + $0x14] sm:$0xf]
        %v434 = vld [vmem:[%s4 + $0x18] sm:$0xf]
        %v435 = vld [vmem:[%s4 + $0x1c] sm:$0xf]
        %v436 = vld [vmem:[%s4 + $0x20] sm:$0xf]
        %v437 = vld [vmem:[%s4 + $0x24] sm:$0xf]
        %v438 = vld [vmem:[%s4 + $0x28] sm:$0xf]
        %v439 = vld [vmem:[%s4 + $0x2c] sm:$0xf]
        %v440 = vld [vmem:[%s4 + $0x30] sm:$0xf]
        %v441 = vld [vmem:[%s4 + $0x34] sm:$0xf]
        %v442 = vld [vmem:[%s4 + $0x38] sm:$0xf]
        %v443 = vld [vmem:[%s4 + $0x3c] sm:$0xf]
        %v444 = vld [vmem:[#allocation2] sm:$0xff]
        %v445 = vld [vmem:[#allocation3] sm:$0xff]
        %v447 = vunpack.c.l.b16 %v444
        %v448 = vunpack.c.h.b16 %v444
        %v449 = vpack.c.b16 %v447, %v447
        %v450 = vpack.c.b16 %v448, %v448
        %451 = vrot.lane.b32.xlu0 %v449, 7
        %v452 = vpop.permute.xlu0 %451
        %453 = vrot.lane.b32.xlu0 %v450, 7
        %v454 = vpop.permute.xlu0 %453
        %vm455 = vcmask 56320
        %v456 = vsel %vm455, %v452, %v454
        %v474 = vunpack.c.l.b16 %v428
        %v475 = vunpack.c.l.b16 %v429
        %v476 = vunpack.c.l.b16 %v430
        %v477 = vunpack.c.l.b16 %v431
        %v478 = vunpack.c.l.b16 %v432
        %v479 = vunpack.c.l.b16 %v433
        %v480 = vunpack.c.l.b16 %v434
        %v481 = vunpack.c.l.b16 %v435
        %v482 = vunpack.c.l.b16 %v436
        %v483 = vunpack.c.l.b16 %v437
        %v484 = vunpack.c.l.b16 %v438
        %v485 = vunpack.c.l.b16 %v439
        %v486 = vunpack.c.l.b16 %v440
        %v487 = vunpack.c.l.b16 %v441
        %v488 = vunpack.c.l.b16 %v442
        %v489 = vunpack.c.l.b16 %v443
        %v490 = vpack.c.b16 %v475, %v474
        %v491 = vpack.c.b16 %v477, %v476
        %v492 = vpack.c.b16 %v479, %v478
        %v493 = vpack.c.b16 %v481, %v480
        %v494 = vpack.c.b16 %v483, %v482
        %v495 = vpack.c.b16 %v485, %v484
        %v496 = vpack.c.b16 %v487, %v486
        %v497 = vpack.c.b16 %v489, %v488
        %506 = vmatprep.subr.bf16.mxu0 0
        %507 = vmatpush1.bf16.msra.mxu0 %v490
        %508 = vmatprep.subr.bf16.mxu0 0
        %509 = vmatpush1.bf16.msra.mxu0 %v491
        %510 = vmatprep.subr.bf16.mxu0 0
        %511 = vmatpush1.bf16.msra.mxu0 %v492
        %512 = vmatprep.subr.bf16.mxu0 0
        %513 = vmatpush1.bf16.msra.mxu0 %v493
        %514 = vmatprep.subr.bf16.mxu0 0
        %515 = vmatpush1.bf16.msra.mxu0 %v494
        %516 = vmatprep.subr.bf16.mxu0 0
        %517 = vmatpush1.bf16.msra.mxu0 %v495
        %518 = vmatprep.subr.bf16.mxu0 0
        %519 = vmatpush1.bf16.msra.mxu0 %v496
        %520 = vmatprep.subr.bf16.mxu0 0
        %521 = vmatpush1.bf16.msra.mxu0 %v497
        %522 = vmatprep.subr.bf16.mxu0 0
        %523 = vmatpush1.bf16.msra.mxu0 0
        %524 = vmatprep.subr.bf16.mxu0 0
        %525 = vmatpush1.bf16.msra.mxu0 0
        %526 = vmatprep.subr.bf16.mxu0 0
        %527 = vmatpush1.bf16.msra.mxu0 0
        %528 = vmatprep.subr.bf16.mxu0 0
        %529 = vmatpush1.bf16.msra.mxu0 0
        %530 = vmatprep.subr.bf16.mxu0 0
        %531 = vmatpush1.bf16.msra.mxu0 0
        %532 = vmatprep.subr.bf16.mxu0 0
        %533 = vmatpush1.bf16.msra.mxu0 0
        %534 = vmatprep.subr.bf16.mxu0 0
        %535 = vmatpush1.bf16.msra.mxu0 0
        %536 = vmatprep.subr.bf16.mxu0 0
        %537 = vmatpush1.bf16.msra.mxu0 0
        %538 = vmatprep.mubr.bf16.mxu0 0
        %539 = vmatmul.mubr.bf16.gmra.mrb[0].mxu0 %v456
        %v540 = vpop.f32.mrb[0].mxu0
        %v541 = vadd.f32 0.0, %v540
        %v542 = vpop.f32.mrb[0].mxu0
        %v543 = vpop.f32.mrb[0].mxu0
        %v544 = vpop.f32.mrb[0].mxu0
        %545 = vdwg.mxu0
        %v562 = vunpack.c.l.b16 %v412
        %v563 = vunpack.c.l.b16 %v413
        %v564 = vunpack.c.l.b16 %v414
        %v565 = vunpack.c.l.b16 %v415
        %v566 = vunpack.c.l.b16 %v416
        %v567 = vunpack.c.l.b16 %v417
        %v568 = vunpack.c.l.b16 %v418
        %v569 = vunpack.c.l.b16 %v419
        %v570 = vunpack.c.l.b16 %v420
        %v571 = vunpack.c.l.b16 %v421
        %v572 = vunpack.c.l.b16 %v422
        %v573 = vunpack.c.l.b16 %v423
        %v574 = vunpack.c.l.b16 %v424
        %v575 = vunpack.c.l.b16 %v425
        %v576 = vunpack.c.l.b16 %v426
        %v577 = vunpack.c.l.b16 %v427
        %v578 = vpack.c.b16 %v563, %v562
        %v579 = vpack.c.b16 %v565, %v564
        %v580 = vpack.c.b16 %v567, %v566
        %v581 = vpack.c.b16 %v569, %v568
        %v582 = vpack.c.b16 %v571, %v570
        %v583 = vpack.c.b16 %v573, %v572
        %v584 = vpack.c.b16 %v575, %v574
        %v585 = vpack.c.b16 %v577, %v576
        %594 = vmatprep.subr.bf16.mxu0 0
        %595 = vmatpush1.bf16.msra.mxu0 %v578
        %596 = vmatprep.subr.bf16.mxu0 0
        %597 = vmatpush1.bf16.msra.mxu0 %v579
        %598 = vmatprep.subr.bf16.mxu0 0
        %599 = vmatpush1.bf16.msra.mxu0 %v580
        %600 = vmatprep.subr.bf16.mxu0 0
        %601 = vmatpush1.bf16.msra.mxu0 %v581
        %602 = vmatprep.subr.bf16.mxu0 0
        %603 = vmatpush1.bf16.msra.mxu0 %v582
        %604 = vmatprep.subr.bf16.mxu0 0
        %605 = vmatpush1.bf16.msra.mxu0 %v583
        %606 = vmatprep.subr.bf16.mxu0 0
        %607 = vmatpush1.bf16.msra.mxu0 %v584
        %608 = vmatprep.subr.bf16.mxu0 0
        %609 = vmatpush1.bf16.msra.mxu0 %v585
        %610 = vmatprep.subr.bf16.mxu0 0
        %611 = vmatpush1.bf16.msra.mxu0 0
        %612 = vmatprep.subr.bf16.mxu0 0
        %613 = vmatpush1.bf16.msra.mxu0 0
        %614 = vmatprep.subr.bf16.mxu0 0
        %615 = vmatpush1.bf16.msra.mxu0 0
        %616 = vmatprep.subr.bf16.mxu0 0
        %617 = vmatpush1.bf16.msra.mxu0 0
        %618 = vmatprep.subr.bf16.mxu0 0
        %619 = vmatpush1.bf16.msra.mxu0 0
        %620 = vmatprep.subr.bf16.mxu0 0
        %621 = vmatpush1.bf16.msra.mxu0 0
        %622 = vmatprep.subr.bf16.mxu0 0
        %623 = vmatpush1.bf16.msra.mxu0 0
        %624 = vmatprep.subr.bf16.mxu0 0
        %625 = vmatpush1.bf16.msra.mxu0 0
        %626 = vmatprep.mubr.bf16.mxu0 0
        %627 = vmatmul.mubr.bf16.gmra.mrb[0].mxu0 %v456
        %v628 = vpop.f32.mrb[0].mxu0
        %v629 = vadd.f32 %v541, %v628
        %v630 = vpop.f32.mrb[0].mxu0
        %v631 = vpop.f32.mrb[0].mxu0
        %v632 = vpop.f32.mrb[0].mxu0
        %633 = vdwg.mxu0
        %v635 = vunpack.c.l.b16 %v445
        %v636 = vunpack.c.h.b16 %v445
        %v637 = vpack.c.b16 %v635, %v635
        %v638 = vpack.c.b16 %v636, %v636
        %639 = vrot.lane.b32.xlu0 %v637, 7
        %v640 = vpop.permute.xlu0 %639
        %641 = vrot.lane.b32.xlu0 %v638, 7
        %v642 = vpop.permute.xlu0 %641
        %v643 = vsel %vm455, %v640, %v642
        %645 = vmatprep.subr.bf16.mxu0 0
        %646 = vmatpush1.bf16.msra.mxu0 %v578
        %647 = vmatprep.subr.bf16.mxu0 0
        %648 = vmatpush1.bf16.msra.mxu0 %v579
        %649 = vmatprep.subr.bf16.mxu0 0
        %650 = vmatpush1.bf16.msra.mxu0 %v580
        %651 = vmatprep.subr.bf16.mxu0 0
        %652 = vmatpush1.bf16.msra.mxu0 %v581
        %653 = vmatprep.subr.bf16.mxu0 0
        %654 = vmatpush1.bf16.msra.mxu0 %v582
        %655 = vmatprep.subr.bf16.mxu0 0
        %656 = vmatpush1.bf16.msra.mxu0 %v583
        %657 = vmatprep.subr.bf16.mxu0 0
        %658 = vmatpush1.bf16.msra.mxu0 %v584
        %659 = vmatprep.subr.bf16.mxu0 0
        %660 = vmatpush1.bf16.msra.mxu0 %v585
        %661 = vmatprep.subr.bf16.mxu0 0
        %662 = vmatpush1.bf16.msra.mxu0 0
        %663 = vmatprep.subr.bf16.mxu0 0
        %664 = vmatpush1.bf16.msra.mxu0 0
        %665 = vmatprep.subr.bf16.mxu0 0
        %666 = vmatpush1.bf16.msra.mxu0 0
        %667 = vmatprep.subr.bf16.mxu0 0
        %668 = vmatpush1.bf16.msra.mxu0 0
        %669 = vmatprep.subr.bf16.mxu0 0
        %670 = vmatpush1.bf16.msra.mxu0 0
        %671 = vmatprep.subr.bf16.mxu0 0
        %672 = vmatpush1.bf16.msra.mxu0 0
        %673 = vmatprep.subr.bf16.mxu0 0
        %674 = vmatpush1.bf16.msra.mxu0 0
        %675 = vmatprep.subr.bf16.mxu0 0
        %676 = vmatpush1.bf16.msra.mxu0 0
        %677 = vmatprep.mubr.bf16.mxu0 0
        %678 = vmatmul.mubr.bf16.gmra.mrb[0].mxu0 %v643
        %v679 = vpop.f32.mrb[0].mxu0
        %v680 = vadd.f32 0.0, %v679
        %v681 = vpop.f32.mrb[0].mxu0
        %v682 = vpop.f32.mrb[0].mxu0
        %v683 = vpop.f32.mrb[0].mxu0
        %684 = vdwg.mxu0
        %v685 = vadd.f32 %v629, %v680
        %686 = vst [vmem:[%s376] sm:$0xff] %v685
        %v687 = vld [vmem:[#allocation2 + $0x4] sm:$0xff]
        %v688 = vld [vmem:[#allocation3 + $0x4] sm:$0xff]
        %v690 = vunpack.c.l.b16 %v687
        %v691 = vunpack.c.h.b16 %v687
        %v692 = vpack.c.b16 %v690, %v690
        %v693 = vpack.c.b16 %v691, %v691
        %694 = vrot.lane.b32.xlu0 %v692, 71
        %v695 = vpop.permute.xlu0 %694
        %696 = vrot.lane.b32.xlu0 %v693, 71
        %v697 = vpop.permute.xlu0 %696
        %vm698 = vcmask 580608
        %v699 = vsel %vm698, %v695, %v697
        %701 = vmatprep.subr.bf16.mxu0 0
        %702 = vmatpush1.bf16.msra.mxu0 %v490
        %703 = vmatprep.subr.bf16.mxu0 0
        %704 = vmatpush1.bf16.msra.mxu0 %v491
        %705 = vmatprep.subr.bf16.mxu0 0
        %706 = vmatpush1.bf16.msra.mxu0 %v492
        %707 = vmatprep.subr.bf16.mxu0 0
        %708 = vmatpush1.bf16.msra.mxu0 %v493
        %709 = vmatprep.subr.bf16.mxu0 0
        %710 = vmatpush1.bf16.msra.mxu0 %v494
        %711 = vmatprep.subr.bf16.mxu0 0
        %712 = vmatpush1.bf16.msra.mxu0 %v495
        %713 = vmatprep.subr.bf16.mxu0 0
        %714 = vmatpush1.bf16.msra.mxu0 %v496
        %715 = vmatprep.subr.bf16.mxu0 0
        %716 = vmatpush1.bf16.msra.mxu0 %v497
        %717 = vmatprep.subr.bf16.mxu0 0
        %718 = vmatpush1.bf16.msra.mxu0 0
        %719 = vmatprep.subr.bf16.mxu0 0
        %720 = vmatpush1.bf16.msra.mxu0 0
        %721 = vmatprep.subr.bf16.mxu0 0
        %722 = vmatpush1.bf16.msra.mxu0 0
        %723 = vmatprep.subr.bf16.mxu0 0
        %724 = vmatpush1.bf16.msra.mxu0 0
        %725 = vmatprep.subr.bf16.mxu0 0
        %726 = vmatpush1.bf16.msra.mxu0 0
        %727 = vmatprep.subr.bf16.mxu0 0
        %728 = vmatpush1.bf16.msra.mxu0 0
        %729 = vmatprep.subr.bf16.mxu0 0
        %730 = vmatpush1.bf16.msra.mxu0 0
        %731 = vmatprep.subr.bf16.mxu0 0
        %732 = vmatpush1.bf16.msra.mxu0 0
        %733 = vmatprep.mubr.bf16.mxu0 0
        %734 = vmatmul.mubr.bf16.gmra.mrb[0].mxu0 %v699
        %v735 = vpop.f32.mrb[0].mxu0
        %v736 = vadd.f32 0.0, %v735
        %v737 = vpop.f32.mrb[0].mxu0
        %v738 = vpop.f32.mrb[0].mxu0
        %v739 = vpop.f32.mrb[0].mxu0
        %740 = vdwg.mxu0
        %741 = vmatprep.subr.bf16.mxu0 0
        %742 = vmatpush1.bf16.msra.mxu0 %v578
        %743 = vmatprep.subr.bf16.mxu0 0
        %744 = vmatpush1.bf16.msra.mxu0 %v579
        %745 = vmatprep.subr.bf16.mxu0 0
        %746 = vmatpush1.bf16.msra.mxu0 %v580
        %747 = vmatprep.subr.bf16.mxu0 0
        %748 = vmatpush1.bf16.msra.mxu0 %v581
        %749 = vmatprep.subr.bf16.mxu0 0
        %750 = vmatpush1.bf16.msra.mxu0 %v582
        %751 = vmatprep.subr.bf16.mxu0 0
        %752 = vmatpush1.bf16.msra.mxu0 %v583
        %753 = vmatprep.subr.bf16.mxu0 0
        %754 = vmatpush1.bf16.msra.mxu0 %v584
        %755 = vmatprep.subr.bf16.mxu0 0
        %756 = vmatpush1.bf16.msra.mxu0 %v585
        %757 = vmatprep.subr.bf16.mxu0 0
        %758 = vmatpush1.bf16.msra.mxu0 0
        %759 = vmatprep.subr.bf16.mxu0 0
        %760 = vmatpush1.bf16.msra.mxu0 0
        %761 = vmatprep.subr.bf16.mxu0 0
        %762 = vmatpush1.bf16.msra.mxu0 0
        %763 = vmatprep.subr.bf16.mxu0 0
        %764 = vmatpush1.bf16.msra.mxu0 0
        %765 = vmatprep.subr.bf16.mxu0 0
        %766 = vmatpush1.bf16.msra.mxu0 0
        %767 = vmatprep.subr.bf16.mxu0 0
        %768 = vmatpush1.bf16.msra.mxu0 0
        %769 = vmatprep.subr.bf16.mxu0 0
        %770 = vmatpush1.bf16.msra.mxu0 0
        %771 = vmatprep.subr.bf16.mxu0 0
        %772 = vmatpush1.bf16.msra.mxu0 0
        %773 = vmatprep.mubr.bf16.mxu0 0
        %774 = vmatmul.mubr.bf16.gmra.mrb[0].mxu0 %v699
        %v775 = vpop.f32.mrb[0].mxu0
        %v776 = vadd.f32 %v736, %v775
        %v777 = vpop.f32.mrb[0].mxu0
        %v778 = vpop.f32.mrb[0].mxu0
        %v779 = vpop.f32.mrb[0].mxu0
        %780 = vdwg.mxu0
        %v782 = vunpack.c.l.b16 %v688
        %v783 = vunpack.c.h.b16 %v688
        %v784 = vpack.c.b16 %v782, %v782
        %v785 = vpack.c.b16 %v783, %v783
        %786 = vrot.lane.b32.xlu0 %v784, 71
        %v787 = vpop.permute.xlu0 %786
        %788 = vrot.lane.b32.xlu0 %v785, 71
        %v789 = vpop.permute.xlu0 %788
        %v790 = vsel %vm698, %v787, %v789
        %792 = vmatprep.subr.bf16.mxu0 0
        %793 = vmatpush1.bf16.msra.mxu0 %v578
        %794 = vmatprep.subr.bf16.mxu0 0
        %795 = vmatpush1.bf16.msra.mxu0 %v579
        %796 = vmatprep.subr.bf16.mxu0 0
        %797 = vmatpush1.bf16.msra.mxu0 %v580
        %798 = vmatprep.subr.bf16.mxu0 0
        %799 = vmatpush1.bf16.msra.mxu0 %v581
        %800 = vmatprep.subr.bf16.mxu0 0
        %801 = vmatpush1.bf16.msra.mxu0 %v582
        %802 = vmatprep.subr.bf16.mxu0 0
        %803 = vmatpush1.bf16.msra.mxu0 %v583
        %804 = vmatprep.subr.bf16.mxu0 0
        %805 = vmatpush1.bf16.msra.mxu0 %v584
        %806 = vmatprep.subr.bf16.mxu0 0
        %807 = vmatpush1.bf16.msra.mxu0 %v585
        %808 = vmatprep.subr.bf16.mxu0 0
        %809 = vmatpush1.bf16.msra.mxu0 0
        %810 = vmatprep.subr.bf16.mxu0 0
        %811 = vmatpush1.bf16.msra.mxu0 0
        %812 = vmatprep.subr.bf16.mxu0 0
        %813 = vmatpush1.bf16.msra.mxu0 0
        %814 = vmatprep.subr.bf16.mxu0 0
        %815 = vmatpush1.bf16.msra.mxu0 0
        %816 = vmatprep.subr.bf16.mxu0 0
        %817 = vmatpush1.bf16.msra.mxu0 0
        %818 = vmatprep.subr.bf16.mxu0 0
        %819 = vmatpush1.bf16.msra.mxu0 0
        %820 = vmatprep.subr.bf16.mxu0 0
        %821 = vmatpush1.bf16.msra.mxu0 0
        %822 = vmatprep.subr.bf16.mxu0 0
        %823 = vmatpush1.bf16.msra.mxu0 0
        %824 = vmatprep.mubr.bf16.mxu0 0
        %825 = vmatmul.mubr.bf16.gmra.mrb[0].mxu0 %v790
        %v826 = vpop.f32.mrb[0].mxu0
        %v827 = vadd.f32 0.0, %v826
        %v828 = vpop.f32.mrb[0].mxu0
        %v829 = vpop.f32.mrb[0].mxu0
        %v830 = vpop.f32.mrb[0].mxu0
        %831 = vdwg.mxu0
        %v832 = vadd.f32 %v776, %v827
        %833 = vst [vmem:[%s376 + $0x8] sm:$0xff] %v832
        %s834 = smul.u32 2, %s22
        %p835 = scmp.lt.s32.totalorder %s21, 0
        %s836 = scalar_select %p835, %s21, 0
        %p837 = scmp.lt.s32.totalorder %s834, 3
        %s838 = scalar_select %p837, %s834, 3
        %s839 = smul.addr %s836, 4
        %s840 = sadd.s32 %s838, %s839
        %s841 = smul.addr %s840, 8
        %s842 = scalar_lea.vmem %s5, %s841
        // Predicated region
        $region53: #{sampling_base_forward.2} parent=39 // pred_check
          %p843 = pneg %p187
        $region54: #{sampling_base_forward.2} parent=39 // pred_check_branch
          %845 = sbr.rel (%p843) target = $region56
        $region55: #{sampling_base_forward.2} parent=39 // pred_region
          %s846 = smul.u32 2, %s22
        $region56: #{sampling_base_forward.2} parent=39 // pred_fallthru
          _
      $region40: #{sampling_base_forward.2} parent=5 // pred_fallthru
        _
      %p847 = scmp.le.s32.totalorder 2, %s12
      // Predicated region
      $region57: #{sampling_base_forward.2} parent=5 // pred_check
        %p848 = pneg %p847
      $region58: #{sampling_base_forward.2} parent=5 // pred_check_branch
        %850 = sbr.rel (%p848) target = $region60
      $region59: #{sampling_base_forward.2} parent=5 // pred_region
        %s851 = ssub.s32 %s12, 2
        // Predicated region
        $region61: #{sampling_base_forward.2} parent=59 // pred_check
          %p852 = pneg %p193
        $region62: #{sampling_base_forward.2} parent=59 // pred_check_branch
          %854 = sbr.rel (%p852) target = $region64
        $region63: #{sampling_base_forward.2} parent=59 // pred_region
          %s855 = smul.u32 2, %s24
          %p856 = scmp.lt.s32.totalorder %s23, 0
          %s857 = scalar_select %p856, %s23, 0
          %p858 = scmp.lt.s32.totalorder %s855, 3
          %s859 = scalar_select %p858, %s855, 3
          %s860 = smul.addr %s857, 4
          %s861 = sadd.s32 %s859, %s860
          %s862 = smul.addr %s861, 8
          %s863 = scalar_lea.vmem %s5, %s862
        $region64: #{sampling_base_forward.2} parent=59 // pred_fallthru
          _
      $region60: #{sampling_base_forward.2} parent=5 // pred_fallthru
        _
    $region6: #{sampling_base_forward.2} parent=1 // loop_footer
      %s16 = sadd.s32 1, %s12
    $region7: #{sampling_base_forward.2} parent=1 // loop_footer_branch
      %11 = sbr.rel target = $region3
    $region8: #{sampling_base_forward.2} parent=1 // loop_exit
      _
    %864 = vsyncpa [#allocation5], 1
    %s865 = scalar_lea.sflag [#allocation5], 1
    %866 = vsyncpa %s865, 1

// kernel: sampling_base_forward.3
$region0: #{sampling_base_forward.3}
  #allocation0 [shape = 'u32[]', space=smem, size = 0x4, offset = 0x4, fixed_abs, tag = 'smem constant byte address 0x4 - core index']
  #allocation1 [shape = 'u32[144,128]{1,0:T(1,128)}', space=vmem, size = 0x12000, scoped, tag = 'internal scratch']
  #allocation2 [shape = 'bf16[8,384]{1,0:T(8,128)(2,1)}', space=vmem, size = 0x1800, scoped, tag = 'scratch operand']
  #allocation3 [shape = 'bf16[8,384]{1,0:T(8,128)(2,1)}', space=vmem, size = 0x1800, scoped, tag = 'scratch operand']
  %s0 = inlined_call_operand.vmem [shape: f32[8,512], index: 0, kind: input, shape index: {}, may-alias: {0,1,2}]
  %s1 = inlined_call_operand.vmem [shape: f32[8,512], index: 1, kind: input, shape index: {}, may-alias: {0,1,2}]
  %s2 = inlined_call_operand.vmem [shape: f32[8,512], index: 2, kind: input, shape index: {}, may-alias: {0,1,2}]
  %s3 = inlined_call_operand.vmem [shape: bf16[128,128], index: 3, kind: input, shape index: {}]
  %s4 = inlined_call_operand.vmem [shape: bf16[128,128], index: 4, kind: input, shape index: {}]
  %s5 = inlined_call_operand.vmem [shape: f32[8,1024], index: 5, kind: output, shape index: {}]
  %s6 = sld [smem:[#allocation0]]
  $region61: #{sampling_base_forward.3} parent=0
    _
  %s8 = ssub.s32 1, %s6
  %s9 = scalar_select 0, %s8, %s6
  loop: start=0, step=1, limit=6
  $region2: #{sampling_base_forward.3} parent=0 // loop_pre_header
    _
  $region3: #{sampling_base_forward.3} parent=0 // loop_header
    %s11 = sphi 0, %s15
    %p12 = scmp.ge.s32.totalorder %s11, 6
    %s18 = sphi 0, %s30
    %s19 = sphi 0, %s26
    %s20 = sphi 0, %s18
    %s21 = sphi 0, %s19
    %s22 = sphi 0, %s20
    %s23 = sphi 0, %s21
    %s35 = sphi 0, %s37
    %s38 = sphi 0, %s35
    %s39 = sphi 0, %s38
    %s55 = sphi 0, %s39
    %s69 = sphi 0, %s71
    %s72 = sphi 0, %s69
    %s73 = sphi 0, %s72
    %s89 = sphi 0, %s73
    %s103 = sphi 0, %s105
    %s106 = sphi 0, %s103
    %s107 = sphi 0, %s106
    %s123 = sphi 0, %s107
    %s127 = sphi 0, %s127
    %s129 = sphi 0, %s127
    %s130 = sphi 0, %s129
    %s144 = sphi 0, %s130
    %s148 = sphi 0, %s148
    %s150 = sphi 0, %s148
    %s151 = sphi 0, %s150
    %s165 = sphi 0, %s151
    %s173 = sphi 0, %s175
    %s176 = sphi 0, %s173
    %s177 = sphi 0, %s176
    %s193 = sphi 0, %s177
  $region4: #{sampling_base_forward.3} parent=0 // loop_header_branch
    %14 = sbr.rel (%p12) target = $region8
  $region5: #{sampling_base_forward.3} parent=0 // loop_body
    %s16 = ssub.s32 %s11, 1
    %s17 = ssub.s32 %s11, 2
    %s24 = sadd.s32 1, %s19
    %p25 = scmp.ge.s32.totalorder %s24, 4
    %s26 = scalar_select %p25, 0, %s24
    %s27 = sadd.s32 1, %s18
    %s28 = scalar_select %p25, %s27, %s18
    %p29 = scmp.ge.s32.totalorder %s28, 1
    %s30 = scalar_select %p29, 0, %s28
    %s31 = ssub.s32 %s18, %s30
    %s32 = ssub.s32 %s19, %s26
    %s33 = sor.u32 %s31, %s32
    %p34 = scmp.eq.s32.totalorder %s33, 0
    %s36 = sadd.s32 %s35, 1
    %s37 = scalar_select %p34, %s35, %s36
    %p40 = pneg %p34
    %p41 = scmp.eq.s32.totalorder %s11, 3
    %p42 = por %p40, %p41
    %p43 = scmp.ne.s32.totalorder %s35, %s38
    %p44 = scmp.eq.s32.totalorder %s11, 0
    %p45 = por %p43, %p44
    %p46 = scmp.ne.s32.totalorder %s35, %s38
    %p47 = scmp.eq.s32.totalorder %s16, 3
    %p48 = por %p46, %p47
    %p49 = scmp.ne.s32.totalorder %s38, %s39
    %p50 = scmp.eq.s32.totalorder %s16, 0
    %p51 = por %p49, %p50
    %p52 = scmp.ne.s32.totalorder %s38, %s39
    %p53 = scmp.eq.s32.totalorder %s17, 3
    %p54 = por %p52, %p53
    %p56 = scmp.ne.s32.totalorder %s39, %s55
    %p57 = scmp.eq.s32.totalorder %s17, 0
    %p58 = por %p56, %p57
    %s59 = ssub.s32 %s19, 1
    %p60 = scmp.gt.s32.totalorder %s59, 0
    %s61 = scalar_select %p60, %s59, 0
    %s62 = ssub.s32 %s26, 1
    %p63 = scmp.gt.s32.totalorder %s62, 0
    %s64 = scalar_select %p63, %s62, 0
    %s65 = ssub.s32 %s18, %s30
    %s66 = ssub.s32 %s61, %s64
    %s67 = sor.u32 %s65, %s66
    %p68 = scmp.eq.s32.totalorder %s67, 0
    %s70 = sadd.s32 %s69, 1
    %s71 = scalar_select %p68, %s69, %s70
    %p74 = pneg %p68
    %p75 = scmp.eq.s32.totalorder %s11, 3
    %p76 = por %p74, %p75
    %p77 = scmp.ne.s32.totalorder %s69, %s72
    %p78 = scmp.eq.s32.totalorder %s11, 0
    %p79 = por %p77, %p78
    %p80 = scmp.ne.s32.totalorder %s69, %s72
    %p81 = scmp.eq.s32.totalorder %s16, 3
    %p82 = por %p80, %p81
    %p83 = scmp.ne.s32.totalorder %s72, %s73
    %p84 = scmp.eq.s32.totalorder %s16, 0
    %p85 = por %p83, %p84
    %p86 = scmp.ne.s32.totalorder %s72, %s73
    %p87 = scmp.eq.s32.totalorder %s17, 3
    %p88 = por %p86, %p87
    %p90 = scmp.ne.s32.totalorder %s73, %s89
    %p91 = scmp.eq.s32.totalorder %s17, 0
    %p92 = por %p90, %p91
    %s93 = sadd.s32 %s19, 1
    %p94 = scmp.lt.s32.totalorder %s93, 3
    %s95 = scalar_select %p94, %s93, 3
    %s96 = sadd.s32 %s26, 1
    %p97 = scmp.lt.s32.totalorder %s96, 3
    %s98 = scalar_select %p97, %s96, 3
    %s99 = ssub.s32 %s18, %s30
    %s100 = ssub.s32 %s95, %s98
    %s101 = sor.u32 %s99, %s100
    %p102 = scmp.eq.s32.totalorder %s101, 0
    %s104 = sadd.s32 %s103, 1
    %s105 = scalar_select %p102, %s103, %s104
    %p108 = pneg %p102
    %p109 = scmp.eq.s32.totalorder %s11, 3
    %p110 = por %p108, %p109
    %p111 = scmp.ne.s32.totalorder %s103, %s106
    %p112 = scmp.eq.s32.totalorder %s11, 0
    %p113 = por %p111, %p112
    %p114 = scmp.ne.s32.totalorder %s103, %s106
    %p115 = scmp.eq.s32.totalorder %s16, 3
    %p116 = por %p114, %p115
    %p117 = scmp.ne.s32.totalorder %s106, %s107
    %p118 = scmp.eq.s32.totalorder %s16, 0
    %p119 = por %p117, %p118
    %p120 = scmp.ne.s32.totalorder %s106, %s107
    %p121 = scmp.eq.s32.totalorder %s17, 3
    %p122 = por %p120, %p121
    %p124 = scmp.ne.s32.totalorder %s107, %s123
    %p125 = scmp.eq.s32.totalorder %s17, 0
    %p126 = por %p124, %p125
    %s128 = sadd.s32 %s127, 1
    %p131 = scmp.eq.s32.totalorder %s11, 3
    %p132 = scmp.ne.s32.totalorder %s127, %s129
    %p133 = scmp.eq.s32.totalorder %s11, 0
    %p134 = por %p132, %p133
    %p135 = scmp.ne.s32.totalorder %s127, %s129
    %p136 = scmp.eq.s32.totalorder %s16, 3
    %p137 = por %p135, %p136
    %p138 = scmp.ne.s32.totalorder %s129, %s130
    %p139 = scmp.eq.s32.totalorder %s16, 0
    %p140 = por %p138, %p139
    %p141 = scmp.ne.s32.totalorder %s129, %s130
    %p142 = scmp.eq.s32.totalorder %s17, 3
    %p143 = por %p141, %p142
    %p145 = scmp.ne.s32.totalorder %s130, %s144
    %p146 = scmp.eq.s32.totalorder %s17, 0
    %p147 = por %p145, %p146
    %s149 = sadd.s32 %s148, 1
    %p152 = scmp.eq.s32.totalorder %s11, 3
    %p153 = scmp.ne.s32.totalorder %s148, %s150
    %p154 = scmp.eq.s32.totalorder %s11, 0
    %p155 = por %p153, %p154
    %p156 = scmp.ne.s32.totalorder %s148, %s150
    %p157 = scmp.eq.s32.totalorder %s16, 3
    %p158 = por %p156, %p157
    %p159 = scmp.ne.s32.totalorder %s150, %s151
    %p160 = scmp.eq.s32.totalorder %s16, 0
    %p161 = por %p159, %p160
    %p162 = scmp.ne.s32.totalorder %s150, %s151
    %p163 = scmp.eq.s32.totalorder %s17, 3
    %p164 = por %p162, %p163
    %p166 = scmp.ne.s32.totalorder %s151, %s165
    %p167 = scmp.eq.s32.totalorder %s17, 0
    %p168 = por %p166, %p167
    %s169 = ssub.s32 %s18, %s30
    %s170 = ssub.s32 %s19, %s26
    %s171 = sor.u32 %s169, %s170
    %p172 = scmp.eq.s32.totalorder %s171, 0
    %s174 = sadd.s32 %s173, 1
    %s175 = scalar_select %p172, %s173, %s174
    %p178 = pneg %p172
    %p179 = scmp.eq.s32.totalorder %s11, 3
    %p180 = por %p178, %p179
    %p181 = scmp.ne.s32.totalorder %s173, %s176
    %p182 = scmp.eq.s32.totalorder %s11, 0
    %p183 = por %p181, %p182
    %p184 = scmp.ne.s32.totalorder %s173, %s176
    %p185 = scmp.eq.s32.totalorder %s16, 3
    %p186 = por %p184, %p185
    %p187 = scmp.ne.s32.totalorder %s176, %s177
    %p188 = scmp.eq.s32.totalorder %s16, 0
    %p189 = por %p187, %p188
    %p190 = scmp.ne.s32.totalorder %s176, %s177
    %p191 = scmp.eq.s32.totalorder %s17, 3
    %p192 = por %p190, %p191
    %p194 = scmp.ne.s32.totalorder %s177, %s193
    %p195 = scmp.eq.s32.totalorder %s17, 0
    %p196 = por %p194, %p195
    %p197 = scmp.le.s32.totalorder 1, %s11
    %p198 = scmp.lt.s32.totalorder %s11, 5
    %p199 = pnand %p197, %p198
    %p200 = pneg %p199
    // Predicated region
    $region9: #{sampling_base_forward.3} parent=5 // pred_check
      _
    $region10: #{sampling_base_forward.3} parent=5 // pred_check_branch
      %202 = sbr.rel (%p199) target = $region12
    $region11: #{sampling_base_forward.3} parent=5 // pred_region
      %s203 = ssub.s32 %s11, 1
      // Predicated region
      $region13: #{sampling_base_forward.3} parent=11 // pred_check
        %p204 = pneg %p140
      $region14: #{sampling_base_forward.3} parent=11 // pred_check_branch
        %206 = sbr.rel (%p204) target = $region16
      $region15: #{sampling_base_forward.3} parent=11 // pred_region
        _
      $region16: #{sampling_base_forward.3} parent=11 // pred_fallthru
        _
      // Predicated region
      $region17: #{sampling_base_forward.3} parent=11 // pred_check
        %p207 = pneg %p161
      $region18: #{sampling_base_forward.3} parent=11 // pred_check_branch
        %209 = sbr.rel (%p207) target = $region20
      $region19: #{sampling_base_forward.3} parent=11 // pred_region
        _
      $region20: #{sampling_base_forward.3} parent=11 // pred_fallthru
        _
    $region12: #{sampling_base_forward.3} parent=5 // pred_fallthru
      _
    %p210 = scmp.lt.s32.totalorder %s11, 4
    // Predicated region
    $region21: #{sampling_base_forward.3} parent=5 // pred_check
      %p211 = pneg %p210
    $region22: #{sampling_base_forward.3} parent=5 // pred_check_branch
      %213 = sbr.rel (%p211) target = $region24
    $region23: #{sampling_base_forward.3} parent=5 // pred_region
      // Predicated region
      $region25: #{sampling_base_forward.3} parent=23 // pred_check
        %p214 = pneg %p45
      $region26: #{sampling_base_forward.3} parent=23 // pred_check_branch
        %216 = sbr.rel (%p214) target = $region28
      $region27: #{sampling_base_forward.3} parent=23 // pred_region
        %p217 = scmp.lt.s32.totalorder %s18, 0
        %s218 = scalar_select %p217, %s18, 0
        %p219 = scmp.lt.s32.totalorder %s19, 3
        %s220 = scalar_select %p219, %s19, 3
        %s221 = smul.addr %s218, 4
        %s222 = sadd.s32 %s220, %s221
        %s223 = smul.addr %s222, 8
        %s224 = scalar_lea.vmem %s0, %s223
      $region28: #{sampling_base_forward.3} parent=23 // pred_fallthru
        _
      // Predicated region
      $region29: #{sampling_base_forward.3} parent=23 // pred_check
        %p225 = pneg %p79
      $region30: #{sampling_base_forward.3} parent=23 // pred_check_branch
        %227 = sbr.rel (%p225) target = $region32
      $region31: #{sampling_base_forward.3} parent=23 // pred_region
        %s228 = ssub.s32 %s19, 1
        %p229 = scmp.gt.s32.totalorder %s228, 0
        %s230 = scalar_select %p229, %s228, 0
        %p231 = scmp.lt.s32.totalorder %s18, 0
        %s232 = scalar_select %p231, %s18, 0
        %p233 = scmp.lt.s32.totalorder %s230, 3
        %s234 = scalar_select %p233, %s230, 3
        %s235 = smul.addr %s232, 4
        %s236 = sadd.s32 %s234, %s235
        %s237 = smul.addr %s236, 8
        %s238 = scalar_lea.vmem %s1, %s237
        %s239 = ssub.s32 %s19, 1
        %p240 = scmp.gt.s32.totalorder %s239, 0
        %s241 = scalar_select %p240, %s239, 0
      $region32: #{sampling_base_forward.3} parent=23 // pred_fallthru
        _
      // Predicated region
      $region33: #{sampling_base_forward.3} parent=23 // pred_check
        %p242 = pneg %p113
      $region34: #{sampling_base_forward.3} parent=23 // pred_check_branch
        %244 = sbr.rel (%p242) target = $region36
      $region35: #{sampling_base_forward.3} parent=23 // pred_region
        %s245 = sadd.s32 %s19, 1
        %p246 = scmp.lt.s32.totalorder %s245, 3
        %s247 = scalar_select %p246, %s245, 3
        %p248 = scmp.lt.s32.totalorder %s18, 0
        %s249 = scalar_select %p248, %s18, 0
        %p250 = scmp.lt.s32.totalorder %s247, 3
        %s251 = scalar_select %p250, %s247, 3
        %s252 = smul.addr %s249, 4
        %s253 = sadd.s32 %s251, %s252
        %s254 = smul.addr %s253, 8
        %s255 = scalar_lea.vmem %s2, %s254
        %s256 = sadd.s32 %s19, 1
        %p257 = scmp.lt.s32.totalorder %s256, 3
        %s258 = scalar_select %p257, %s256, 3
      $region36: #{sampling_base_forward.3} parent=23 // pred_fallthru
        _
    $region24: #{sampling_base_forward.3} parent=5 // pred_fallthru
      _
    %p259 = scmp.le.s32.totalorder 1, %s11
    %p260 = scmp.lt.s32.totalorder %s11, 5
    %p261 = pnand %p259, %p260
    %p262 = pneg %p261
    // Predicated region
    $region37: #{sampling_base_forward.3} parent=5 // pred_check
      _
    $region38: #{sampling_base_forward.3} parent=5 // pred_check_branch
      %264 = sbr.rel (%p261) target = $region40
    $region39: #{sampling_base_forward.3} parent=5 // pred_region
      %s265 = ssub.s32 %s11, 1
      %p266 = scmp.lt.s32.totalorder %s20, 0
      %s267 = scalar_select %p266, %s20, 0
      %p268 = scmp.lt.s32.totalorder %s21, 3
      %s269 = scalar_select %p268, %s21, 3
      %s270 = smul.addr %s267, 4
      %s271 = sadd.s32 %s269, %s270
      %s272 = smul.addr %s271, 8
      %s273 = scalar_lea.vmem %s0, %s272
      %p274 = pneg %p51
      %p275 = pneg %p48
      %s276 = ssub.s32 %s21, 1
      %p277 = scmp.gt.s32.totalorder %s276, 0
      %s278 = scalar_select %p277, %s276, 0
      %p279 = scmp.lt.s32.totalorder %s20, 0
      %s280 = scalar_select %p279, %s20, 0
      %p281 = scmp.lt.s32.totalorder %s278, 3
      %s282 = scalar_select %p281, %s278, 3
      %s283 = smul.addr %s280, 4
      %s284 = sadd.s32 %s282, %s283
      %s285 = smul.addr %s284, 8
      %s286 = scalar_lea.vmem %s1, %s285
      %p287 = pneg %p85
      %p288 = pneg %p82
      %s289 = sadd.s32 %s21, 1
      %p290 = scmp.lt.s32.totalorder %s289, 3
      %s291 = scalar_select %p290, %s289, 3
      %p292 = scmp.lt.s32.totalorder %s20, 0
      %s293 = scalar_select %p292, %s20, 0
      %p294 = scmp.lt.s32.totalorder %s291, 3
      %s295 = scalar_select %p294, %s291, 3
      %s296 = smul.addr %s293, 4
      %s297 = sadd.s32 %s295, %s296
      %s298 = smul.addr %s297, 8
      %s299 = scalar_lea.vmem %s2, %s298
      %p300 = pneg %p119
      %p301 = pneg %p116
      %p302 = pneg %p140
      %p303 = pneg %p137
      %p304 = pneg %p161
      %p305 = pneg %p158
      %p306 = pneg %p189
      %p307 = pneg %p186
      %s308 = smul.u32 2, %s21
      %p309 = scmp.lt.s32.totalorder %s20, 0
      %s310 = scalar_select %p309, %s20, 0
      %p311 = scmp.lt.s32.totalorder %s308, 7
      %s312 = scalar_select %p311, %s308, 7
      %s313 = smul.addr %s310, 8
      %s314 = sadd.s32 %s312, %s313
      %s315 = smul.addr %s314, 8
      %s316 = scalar_lea.vmem %s5, %s315
      %p317 = scmp.lt.s32.totalorder %s20, 0
      %s318 = scalar_select %p317, %s20, 0
      %p319 = scmp.lt.s32.totalorder %s21, 3
      %s320 = scalar_select %p319, %s21, 3
      %s321 = smul.addr %s318, 4
      %s322 = sadd.s32 %s320, %s321
      %s323 = smul.addr %s322, 8
      %s324 = scalar_lea.vmem %s0, %s323
      %s325 = ssub.s32 %s21, 1
      %p326 = scmp.gt.s32.totalorder %s325, 0
      %s327 = scalar_select %p326, %s325, 0
      %p328 = scmp.lt.s32.totalorder %s20, 0
      %s329 = scalar_select %p328, %s20, 0
      %p330 = scmp.lt.s32.totalorder %s327, 3
      %s331 = scalar_select %p330, %s327, 3
      %s332 = smul.addr %s329, 4
      %s333 = sadd.s32 %s331, %s332
      %s334 = smul.addr %s333, 8
      %s335 = scalar_lea.vmem %s1, %s334
      %s336 = ssub.s32 %s21, 1
      %p337 = scmp.gt.s32.totalorder %s336, 0
      %s338 = scalar_select %p337, %s336, 0
      %s339 = sadd.s32 %s21, 1
      %p340 = scmp.lt.s32.totalorder %s339, 3
      %s341 = scalar_select %p340, %s339, 3
      %p342 = scmp.lt.s32.totalorder %s20, 0
      %s343 = scalar_select %p342, %s20, 0
      %p344 = scmp.lt.s32.totalorder %s341, 3
      %s345 = scalar_select %p344, %s341, 3
      %s346 = smul.addr %s343, 4
      %s347 = sadd.s32 %s345, %s346
      %s348 = smul.addr %s347, 8
      %s349 = scalar_lea.vmem %s2, %s348
      %s350 = sadd.s32 %s21, 1
      %p351 = scmp.lt.s32.totalorder %s350, 3
      %s352 = scalar_select %p351, %s350, 3
      %s353 = smul.u32 2, %s21
      %p354 = scmp.lt.s32.totalorder %s20, 0
      %s355 = scalar_select %p354, %s20, 0
      %p356 = scmp.lt.s32.totalorder %s353, 7
      %s357 = scalar_select %p356, %s353, 7
      %s358 = smul.addr %s355, 8
      %s359 = sadd.s32 %s357, %s358
      %s360 = smul.addr %s359, 8
      %s361 = scalar_lea.vmem %s5, %s360
      %s362 = smul.u32 2, %s21
      %v364 = vld [vmem:[%s324] sm:$0xff]
      %v365 = vpack.c.bf16 %v364, %v364
      %v366 = vunpack.c.l.bf16 %v365
      %v367 = vsub.f32 %v364, %v366
      %v368 = vpack.c.bf16 %v367, %v367
      %369 = vst [vmem:[#allocation2 + $0x4] sm:$0xf] %v365
      %370 = vst [vmem:[#allocation3 + $0x4] sm:$0xf] %v368
      %v371 = vld [vmem:[%s335] sm:$0xff]
      %v372 = vpack.c.bf16 %v371, %v371
      %v373 = vunpack.c.l.bf16 %v372
      %v374 = vsub.f32 %v371, %v373
      %v375 = vpack.c.bf16 %v374, %v374
      %376 = vst [vmem:[#allocation2] sm:$0xf] %v372
      %377 = vst [vmem:[#allocation3] sm:$0xf] %v375
      %v378 = vld [vmem:[%s349] sm:$0xff]
      %v379 = vpack.c.bf16 %v378, %v378
      %v380 = vunpack.c.l.bf16 %v379
      %v381 = vsub.f32 %v378, %v380
      %v382 = vpack.c.bf16 %v381, %v381
      %383 = vst [vmem:[#allocation2 + $0x8] sm:$0xf] %v379
      %384 = vst [vmem:[#allocation3 + $0x8] sm:$0xf] %v382
      %p385 = scmp.eq.s32.totalorder %s21, 0
      // Predicated region
      $region41: #{sampling_base_forward.3} parent=39 // pred_check
        %p386 = pneg %p385
      $region42: #{sampling_base_forward.3} parent=39 // pred_check_branch
        %388 = sbr.rel (%p386) target = $region44
      $region43: #{sampling_base_forward.3} parent=39 // pred_region
        %389 = vst [vmem:[#allocation2] sm:$0xf] 0
        %390 = vst [vmem:[#allocation3] sm:$0xf] 0
      $region44: #{sampling_base_forward.3} parent=39 // pred_fallthru
        _
      %p391 = scmp.eq.s32.totalorder %s21, 3
      // Predicated region
      $region45: #{sampling_base_forward.3} parent=39 // pred_check
        %p392 = pneg %p391
      $region46: #{sampling_base_forward.3} parent=39 // pred_check_branch
        %394 = sbr.rel (%p392) target = $region48
      $region47: #{sampling_base_forward.3} parent=39 // pred_region
        %395 = vst [vmem:[#allocation2 + $0x8] sm:$0xf] 0
        %396 = vst [vmem:[#allocation3 + $0x8] sm:$0xf] 0
      $region48: #{sampling_base_forward.3} parent=39 // pred_fallthru
        _
      %v397 = vld [vmem:[%s3] sm:$0xf]
      %v398 = vld [vmem:[%s3 + $0x4] sm:$0xf]
      %v399 = vld [vmem:[%s3 + $0x8] sm:$0xf]
      %v400 = vld [vmem:[%s3 + $0xc] sm:$0xf]
      %v401 = vld [vmem:[%s3 + $0x10] sm:$0xf]
      %v402 = vld [vmem:[%s3 + $0x14] sm:$0xf]
      %v403 = vld [vmem:[%s3 + $0x18] sm:$0xf]
      %v404 = vld [vmem:[%s3 + $0x1c] sm:$0xf]
      %v405 = vld [vmem:[%s3 + $0x20] sm:$0xf]
      %v406 = vld [vmem:[%s3 + $0x24] sm:$0xf]
      %v407 = vld [vmem:[%s3 + $0x28] sm:$0xf]
      %v408 = vld [vmem:[%s3 + $0x2c] sm:$0xf]
      %v409 = vld [vmem:[%s3 + $0x30] sm:$0xf]
      %v410 = vld [vmem:[%s3 + $0x34] sm:$0xf]
      %v411 = vld [vmem:[%s3 + $0x38] sm:$0xf]
      %v412 = vld [vmem:[%s3 + $0x3c] sm:$0xf]
      %v413 = vld [vmem:[%s4] sm:$0xf]
      %v414 = vld [vmem:[%s4 + $0x4] sm:$0xf]
      %v415 = vld [vmem:[%s4 + $0x8] sm:$0xf]
      %v416 = vld [vmem:[%s4 + $0xc] sm:$0xf]
      %v417 = vld [vmem:[%s4 + $0x10] sm:$0xf]
      %v418 = vld [vmem:[%s4 + $0x14] sm:$0xf]
      %v419 = vld [vmem:[%s4 + $0x18] sm:$0xf]
      %v420 = vld [vmem:[%s4 + $0x1c] sm:$0xf]
      %v421 = vld [vmem:[%s4 + $0x20] sm:$0xf]
      %v422 = vld [vmem:[%s4 + $0x24] sm:$0xf]
      %v423 = vld [vmem:[%s4 + $0x28] sm:$0xf]
      %v424 = vld [vmem:[%s4 + $0x2c] sm:$0xf]
      %v425 = vld [vmem:[%s4 + $0x30] sm:$0xf]
      %v426 = vld [vmem:[%s4 + $0x34] sm:$0xf]
      %v427 = vld [vmem:[%s4 + $0x38] sm:$0xf]
      %v428 = vld [vmem:[%s4 + $0x3c] sm:$0xf]
      %v429 = vld [vmem:[#allocation2] sm:$0xff]
      %v430 = vld [vmem:[#allocation3] sm:$0xff]
      %v432 = vunpack.c.l.b16 %v429
      %v433 = vunpack.c.h.b16 %v429
      %v434 = vpack.c.b16 %v432, %v432
      %v435 = vpack.c.b16 %v433, %v433
      %436 = vrot.lane.b32.xlu0 %v434, 7
      %v437 = vpop.permute.xlu0 %436
      %438 = vrot.lane.b32.xlu0 %v435, 7
      %v439 = vpop.permute.xlu0 %438
      %vm440 = vcmask 56320
      %v441 = vsel %vm440, %v437, %v439
      %v459 = vunpack.c.l.b16 %v413
      %v460 = vunpack.c.l.b16 %v414
      %v461 = vunpack.c.l.b16 %v415
      %v462 = vunpack.c.l.b16 %v416
      %v463 = vunpack.c.l.b16 %v417
      %v464 = vunpack.c.l.b16 %v418
      %v465 = vunpack.c.l.b16 %v419
      %v466 = vunpack.c.l.b16 %v420
      %v467 = vunpack.c.l.b16 %v421
      %v468 = vunpack.c.l.b16 %v422
      %v469 = vunpack.c.l.b16 %v423
      %v470 = vunpack.c.l.b16 %v424
      %v471 = vunpack.c.l.b16 %v425
      %v472 = vunpack.c.l.b16 %v426
      %v473 = vunpack.c.l.b16 %v427
      %v474 = vunpack.c.l.b16 %v428
      %v475 = vpack.c.b16 %v460, %v459
      %v476 = vpack.c.b16 %v462, %v461
      %v477 = vpack.c.b16 %v464, %v463
      %v478 = vpack.c.b16 %v466, %v465
      %v479 = vpack.c.b16 %v468, %v467
      %v480 = vpack.c.b16 %v470, %v469
      %v481 = vpack.c.b16 %v472, %v471
      %v482 = vpack.c.b16 %v474, %v473
      %491 = vmatprep.subr.bf16.mxu0 0
      %492 = vmatpush1.bf16.msra.mxu0 %v475
      %493 = vmatprep.subr.bf16.mxu0 0
      %494 = vmatpush1.bf16.msra.mxu0 %v476
      %495 = vmatprep.subr.bf16.mxu0 0
      %496 = vmatpush1.bf16.msra.mxu0 %v477
      %497 = vmatprep.subr.bf16.mxu0 0
      %498 = vmatpush1.bf16.msra.mxu0 %v478
      %499 = vmatprep.subr.bf16.mxu0 0
      %500 = vmatpush1.bf16.msra.mxu0 %v479
      %501 = vmatprep.subr.bf16.mxu0 0
      %502 = vmatpush1.bf16.msra.mxu0 %v480
      %503 = vmatprep.subr.bf16.mxu0 0
      %504 = vmatpush1.bf16.msra.mxu0 %v481
      %505 = vmatprep.subr.bf16.mxu0 0
      %506 = vmatpush1.bf16.msra.mxu0 %v482
      %507 = vmatprep.subr.bf16.mxu0 0
      %508 = vmatpush1.bf16.msra.mxu0 0
      %509 = vmatprep.subr.bf16.mxu0 0
      %510 = vmatpush1.bf16.msra.mxu0 0
      %511 = vmatprep.subr.bf16.mxu0 0
      %512 = vmatpush1.bf16.msra.mxu0 0
      %513 = vmatprep.subr.bf16.mxu0 0
      %514 = vmatpush1.bf16.msra.mxu0 0
      %515 = vmatprep.subr.bf16.mxu0 0
      %516 = vmatpush1.bf16.msra.mxu0 0
      %517 = vmatprep.subr.bf16.mxu0 0
      %518 = vmatpush1.bf16.msra.mxu0 0
      %519 = vmatprep.subr.bf16.mxu0 0
      %520 = vmatpush1.bf16.msra.mxu0 0
      %521 = vmatprep.subr.bf16.mxu0 0
      %522 = vmatpush1.bf16.msra.mxu0 0
      %523 = vmatprep.mubr.bf16.mxu0 0
      %524 = vmatmul.mubr.bf16.gmra.mrb[0].mxu0 %v441
      %v525 = vpop.f32.mrb[0].mxu0
      %v526 = vadd.f32 0.0, %v525
      %v527 = vpop.f32.mrb[0].mxu0
      %v528 = vpop.f32.mrb[0].mxu0
      %v529 = vpop.f32.mrb[0].mxu0
      %530 = vdwg.mxu0
      %v547 = vunpack.c.l.b16 %v397
      %v548 = vunpack.c.l.b16 %v398
      %v549 = vunpack.c.l.b16 %v399
      %v550 = vunpack.c.l.b16 %v400
      %v551 = vunpack.c.l.b16 %v401
      %v552 = vunpack.c.l.b16 %v402
      %v553 = vunpack.c.l.b16 %v403
      %v554 = vunpack.c.l.b16 %v404
      %v555 = vunpack.c.l.b16 %v405
      %v556 = vunpack.c.l.b16 %v406
      %v557 = vunpack.c.l.b16 %v407
      %v558 = vunpack.c.l.b16 %v408
      %v559 = vunpack.c.l.b16 %v409
      %v560 = vunpack.c.l.b16 %v410
      %v561 = vunpack.c.l.b16 %v411
      %v562 = vunpack.c.l.b16 %v412
      %v563 = vpack.c.b16 %v548, %v547
      %v564 = vpack.c.b16 %v550, %v549
      %v565 = vpack.c.b16 %v552, %v551
      %v566 = vpack.c.b16 %v554, %v553
      %v567 = vpack.c.b16 %v556, %v555
      %v568 = vpack.c.b16 %v558, %v557
      %v569 = vpack.c.b16 %v560, %v559
      %v570 = vpack.c.b16 %v562, %v561
      %579 = vmatprep.subr.bf16.mxu0 0
      %580 = vmatpush1.bf16.msra.mxu0 %v563
      %581 = vmatprep.subr.bf16.mxu0 0
      %582 = vmatpush1.bf16.msra.mxu0 %v564
      %583 = vmatprep.subr.bf16.mxu0 0
      %584 = vmatpush1.bf16.msra.mxu0 %v565
      %585 = vmatprep.subr.bf16.mxu0 0
      %586 = vmatpush1.bf16.msra.mxu0 %v566
      %587 = vmatprep.subr.bf16.mxu0 0
      %588 = vmatpush1.bf16.msra.mxu0 %v567
      %589 = vmatprep.subr.bf16.mxu0 0
      %590 = vmatpush1.bf16.msra.mxu0 %v568
      %591 = vmatprep.subr.bf16.mxu0 0
      %592 = vmatpush1.bf16.msra.mxu0 %v569
      %593 = vmatprep.subr.bf16.mxu0 0
      %594 = vmatpush1.bf16.msra.mxu0 %v570
      %595 = vmatprep.subr.bf16.mxu0 0
      %596 = vmatpush1.bf16.msra.mxu0 0
      %597 = vmatprep.subr.bf16.mxu0 0
      %598 = vmatpush1.bf16.msra.mxu0 0
      %599 = vmatprep.subr.bf16.mxu0 0
      %600 = vmatpush1.bf16.msra.mxu0 0
      %601 = vmatprep.subr.bf16.mxu0 0
      %602 = vmatpush1.bf16.msra.mxu0 0
      %603 = vmatprep.subr.bf16.mxu0 0
      %604 = vmatpush1.bf16.msra.mxu0 0
      %605 = vmatprep.subr.bf16.mxu0 0
      %606 = vmatpush1.bf16.msra.mxu0 0
      %607 = vmatprep.subr.bf16.mxu0 0
      %608 = vmatpush1.bf16.msra.mxu0 0
      %609 = vmatprep.subr.bf16.mxu0 0
      %610 = vmatpush1.bf16.msra.mxu0 0
      %611 = vmatprep.mubr.bf16.mxu0 0
      %612 = vmatmul.mubr.bf16.gmra.mrb[0].mxu0 %v441
      %v613 = vpop.f32.mrb[0].mxu0
      %v614 = vadd.f32 %v526, %v613
      %v615 = vpop.f32.mrb[0].mxu0
      %v616 = vpop.f32.mrb[0].mxu0
      %v617 = vpop.f32.mrb[0].mxu0
      %618 = vdwg.mxu0
      %v620 = vunpack.c.l.b16 %v430
      %v621 = vunpack.c.h.b16 %v430
      %v622 = vpack.c.b16 %v620, %v620
      %v623 = vpack.c.b16 %v621, %v621
      %624 = vrot.lane.b32.xlu0 %v622, 7
      %v625 = vpop.permute.xlu0 %624
      %626 = vrot.lane.b32.xlu0 %v623, 7
      %v627 = vpop.permute.xlu0 %626
      %v628 = vsel %vm440, %v625, %v627
      %630 = vmatprep.subr.bf16.mxu0 0
      %631 = vmatpush1.bf16.msra.mxu0 %v563
      %632 = vmatprep.subr.bf16.mxu0 0
      %633 = vmatpush1.bf16.msra.mxu0 %v564
      %634 = vmatprep.subr.bf16.mxu0 0
      %635 = vmatpush1.bf16.msra.mxu0 %v565
      %636 = vmatprep.subr.bf16.mxu0 0
      %637 = vmatpush1.bf16.msra.mxu0 %v566
      %638 = vmatprep.subr.bf16.mxu0 0
      %639 = vmatpush1.bf16.msra.mxu0 %v567
      %640 = vmatprep.subr.bf16.mxu0 0
      %641 = vmatpush1.bf16.msra.mxu0 %v568
      %642 = vmatprep.subr.bf16.mxu0 0
      %643 = vmatpush1.bf16.msra.mxu0 %v569
      %644 = vmatprep.subr.bf16.mxu0 0
      %645 = vmatpush1.bf16.msra.mxu0 %v570
      %646 = vmatprep.subr.bf16.mxu0 0
      %647 = vmatpush1.bf16.msra.mxu0 0
      %648 = vmatprep.subr.bf16.mxu0 0
      %649 = vmatpush1.bf16.msra.mxu0 0
      %650 = vmatprep.subr.bf16.mxu0 0
      %651 = vmatpush1.bf16.msra.mxu0 0
      %652 = vmatprep.subr.bf16.mxu0 0
      %653 = vmatpush1.bf16.msra.mxu0 0
      %654 = vmatprep.subr.bf16.mxu0 0
      %655 = vmatpush1.bf16.msra.mxu0 0
      %656 = vmatprep.subr.bf16.mxu0 0
      %657 = vmatpush1.bf16.msra.mxu0 0
      %658 = vmatprep.subr.bf16.mxu0 0
      %659 = vmatpush1.bf16.msra.mxu0 0
      %660 = vmatprep.subr.bf16.mxu0 0
      %661 = vmatpush1.bf16.msra.mxu0 0
      %662 = vmatprep.mubr.bf16.mxu0 0
      %663 = vmatmul.mubr.bf16.gmra.mrb[0].mxu0 %v628
      %v664 = vpop.f32.mrb[0].mxu0
      %v665 = vadd.f32 0.0, %v664
      %v666 = vpop.f32.mrb[0].mxu0
      %v667 = vpop.f32.mrb[0].mxu0
      %v668 = vpop.f32.mrb[0].mxu0
      %669 = vdwg.mxu0
      %v670 = vadd.f32 %v614, %v665
      %671 = vst [vmem:[%s361] sm:$0xff] %v670
      %v672 = vld [vmem:[#allocation2 + $0x4] sm:$0xff]
      %v673 = vld [vmem:[#allocation3 + $0x4] sm:$0xff]
      %v675 = vunpack.c.l.b16 %v672
      %v676 = vunpack.c.h.b16 %v672
      %v677 = vpack.c.b16 %v675, %v675
      %v678 = vpack.c.b16 %v676, %v676
      %679 = vrot.lane.b32.xlu0 %v677, 71
      %v680 = vpop.permute.xlu0 %679
      %681 = vrot.lane.b32.xlu0 %v678, 71
      %v682 = vpop.permute.xlu0 %681
      %vm683 = vcmask 580608
      %v684 = vsel %vm683, %v680, %v682
      %686 = vmatprep.subr.bf16.mxu0 0
      %687 = vmatpush1.bf16.msra.mxu0 %v475
      %688 = vmatprep.subr.bf16.mxu0 0
      %689 = vmatpush1.bf16.msra.mxu0 %v476
      %690 = vmatprep.subr.bf16.mxu0 0
      %691 = vmatpush1.bf16.msra.mxu0 %v477
      %692 = vmatprep.subr.bf16.mxu0 0
      %693 = vmatpush1.bf16.msra.mxu0 %v478
      %694 = vmatprep.subr.bf16.mxu0 0
      %695 = vmatpush1.bf16.msra.mxu0 %v479
      %696 = vmatprep.subr.bf16.mxu0 0
      %697 = vmatpush1.bf16.msra.mxu0 %v480
      %698 = vmatprep.subr.bf16.mxu0 0
      %699 = vmatpush1.bf16.msra.mxu0 %v481
      %700 = vmatprep.subr.bf16.mxu0 0
      %701 = vmatpush1.bf16.msra.mxu0 %v482
      %702 = vmatprep.subr.bf16.mxu0 0
      %703 = vmatpush1.bf16.msra.mxu0 0
      %704 = vmatprep.subr.bf16.mxu0 0
      %705 = vmatpush1.bf16.msra.mxu0 0
      %706 = vmatprep.subr.bf16.mxu0 0
      %707 = vmatpush1.bf16.msra.mxu0 0
      %708 = vmatprep.subr.bf16.mxu0 0
      %709 = vmatpush1.bf16.msra.mxu0 0
      %710 = vmatprep.subr.bf16.mxu0 0
      %711 = vmatpush1.bf16.msra.mxu0 0
      %712 = vmatprep.subr.bf16.mxu0 0
      %713 = vmatpush1.bf16.msra.mxu0 0
      %714 = vmatprep.subr.bf16.mxu0 0
      %715 = vmatpush1.bf16.msra.mxu0 0
      %716 = vmatprep.subr.bf16.mxu0 0
      %717 = vmatpush1.bf16.msra.mxu0 0
      %718 = vmatprep.mubr.bf16.mxu0 0
      %719 = vmatmul.mubr.bf16.gmra.mrb[0].mxu0 %v684
      %v720 = vpop.f32.mrb[0].mxu0
      %v721 = vadd.f32 0.0, %v720
      %v722 = vpop.f32.mrb[0].mxu0
      %v723 = vpop.f32.mrb[0].mxu0
      %v724 = vpop.f32.mrb[0].mxu0
      %725 = vdwg.mxu0
      %726 = vmatprep.subr.bf16.mxu0 0
      %727 = vmatpush1.bf16.msra.mxu0 %v563
      %728 = vmatprep.subr.bf16.mxu0 0
      %729 = vmatpush1.bf16.msra.mxu0 %v564
      %730 = vmatprep.subr.bf16.mxu0 0
      %731 = vmatpush1.bf16.msra.mxu0 %v565
      %732 = vmatprep.subr.bf16.mxu0 0
      %733 = vmatpush1.bf16.msra.mxu0 %v566
      %734 = vmatprep.subr.bf16.mxu0 0
      %735 = vmatpush1.bf16.msra.mxu0 %v567
      %736 = vmatprep.subr.bf16.mxu0 0
      %737 = vmatpush1.bf16.msra.mxu0 %v568
      %738 = vmatprep.subr.bf16.mxu0 0
      %739 = vmatpush1.bf16.msra.mxu0 %v569
      %740 = vmatprep.subr.bf16.mxu0 0
      %741 = vmatpush1.bf16.msra.mxu0 %v570
      %742 = vmatprep.subr.bf16.mxu0 0
      %743 = vmatpush1.bf16.msra.mxu0 0
      %744 = vmatprep.subr.bf16.mxu0 0
      %745 = vmatpush1.bf16.msra.mxu0 0
      %746 = vmatprep.subr.bf16.mxu0 0
      %747 = vmatpush1.bf16.msra.mxu0 0
      %748 = vmatprep.subr.bf16.mxu0 0
      %749 = vmatpush1.bf16.msra.mxu0 0
      %750 = vmatprep.subr.bf16.mxu0 0
      %751 = vmatpush1.bf16.msra.mxu0 0
      %752 = vmatprep.subr.bf16.mxu0 0
      %753 = vmatpush1.bf16.msra.mxu0 0
      %754 = vmatprep.subr.bf16.mxu0 0
      %755 = vmatpush1.bf16.msra.mxu0 0
      %756 = vmatprep.subr.bf16.mxu0 0
      %757 = vmatpush1.bf16.msra.mxu0 0
      %758 = vmatprep.mubr.bf16.mxu0 0
      %759 = vmatmul.mubr.bf16.gmra.mrb[0].mxu0 %v684
      %v760 = vpop.f32.mrb[0].mxu0
      %v761 = vadd.f32 %v721, %v760
      %v762 = vpop.f32.mrb[0].mxu0
      %v763 = vpop.f32.mrb[0].mxu0
      %v764 = vpop.f32.mrb[0].mxu0
      %765 = vdwg.mxu0
      %v767 = vunpack.c.l.b16 %v673
      %v768 = vunpack.c.h.b16 %v673
      %v769 = vpack.c.b16 %v767, %v767
      %v770 = vpack.c.b16 %v768, %v768
      %771 = vrot.lane.b32.xlu0 %v769, 71
      %v772 = vpop.permute.xlu0 %771
      %773 = vrot.lane.b32.xlu0 %v770, 71
      %v774 = vpop.permute.xlu0 %773
      %v775 = vsel %vm683, %v772, %v774
      %777 = vmatprep.subr.bf16.mxu0 0
      %778 = vmatpush1.bf16.msra.mxu0 %v563
      %779 = vmatprep.subr.bf16.mxu0 0
      %780 = vmatpush1.bf16.msra.mxu0 %v564
      %781 = vmatprep.subr.bf16.mxu0 0
      %782 = vmatpush1.bf16.msra.mxu0 %v565
      %783 = vmatprep.subr.bf16.mxu0 0
      %784 = vmatpush1.bf16.msra.mxu0 %v566
      %785 = vmatprep.subr.bf16.mxu0 0
      %786 = vmatpush1.bf16.msra.mxu0 %v567
      %787 = vmatprep.subr.bf16.mxu0 0
      %788 = vmatpush1.bf16.msra.mxu0 %v568
      %789 = vmatprep.subr.bf16.mxu0 0
      %790 = vmatpush1.bf16.msra.mxu0 %v569
      %791 = vmatprep.subr.bf16.mxu0 0
      %792 = vmatpush1.bf16.msra.mxu0 %v570
      %793 = vmatprep.subr.bf16.mxu0 0
      %794 = vmatpush1.bf16.msra.mxu0 0
      %795 = vmatprep.subr.bf16.mxu0 0
      %796 = vmatpush1.bf16.msra.mxu0 0
      %797 = vmatprep.subr.bf16.mxu0 0
      %798 = vmatpush1.bf16.msra.mxu0 0
      %799 = vmatprep.subr.bf16.mxu0 0
      %800 = vmatpush1.bf16.msra.mxu0 0
      %801 = vmatprep.subr.bf16.mxu0 0
      %802 = vmatpush1.bf16.msra.mxu0 0
      %803 = vmatprep.subr.bf16.mxu0 0
      %804 = vmatpush1.bf16.msra.mxu0 0
      %805 = vmatprep.subr.bf16.mxu0 0
      %806 = vmatpush1.bf16.msra.mxu0 0
      %807 = vmatprep.subr.bf16.mxu0 0
      %808 = vmatpush1.bf16.msra.mxu0 0
      %809 = vmatprep.mubr.bf16.mxu0 0
      %810 = vmatmul.mubr.bf16.gmra.mrb[0].mxu0 %v775
      %v811 = vpop.f32.mrb[0].mxu0
      %v812 = vadd.f32 0.0, %v811
      %v813 = vpop.f32.mrb[0].mxu0
      %v814 = vpop.f32.mrb[0].mxu0
      %v815 = vpop.f32.mrb[0].mxu0
      %816 = vdwg.mxu0
      %v817 = vadd.f32 %v761, %v812
      %818 = vst [vmem:[%s361 + $0x8] sm:$0xff] %v817
      %s819 = smul.u32 2, %s21
      %p820 = scmp.lt.s32.totalorder %s20, 0
      %s821 = scalar_select %p820, %s20, 0
      %p822 = scmp.lt.s32.totalorder %s819, 7
      %s823 = scalar_select %p822, %s819, 7
      %s824 = smul.addr %s821, 8
      %s825 = sadd.s32 %s823, %s824
      %s826 = smul.addr %s825, 8
      %s827 = scalar_lea.vmem %s5, %s826
      // Predicated region
      $region49: #{sampling_base_forward.3} parent=39 // pred_check
        %p828 = pneg %p186
      $region50: #{sampling_base_forward.3} parent=39 // pred_check_branch
        %830 = sbr.rel (%p828) target = $region52
      $region51: #{sampling_base_forward.3} parent=39 // pred_region
        %s831 = smul.u32 2, %s21
      $region52: #{sampling_base_forward.3} parent=39 // pred_fallthru
        _
    $region40: #{sampling_base_forward.3} parent=5 // pred_fallthru
      _
    %p832 = scmp.le.s32.totalorder 2, %s11
    // Predicated region
    $region53: #{sampling_base_forward.3} parent=5 // pred_check
      %p833 = pneg %p832
    $region54: #{sampling_base_forward.3} parent=5 // pred_check_branch
      %835 = sbr.rel (%p833) target = $region56
    $region55: #{sampling_base_forward.3} parent=5 // pred_region
      %s836 = ssub.s32 %s11, 2
      // Predicated region
      $region57: #{sampling_base_forward.3} parent=55 // pred_check
        %p837 = pneg %p192
      $region58: #{sampling_base_forward.3} parent=55 // pred_check_branch
        %839 = sbr.rel (%p837) target = $region60
      $region59: #{sampling_base_forward.3} parent=55 // pred_region
        %s840 = smul.u32 2, %s23
        %p841 = scmp.lt.s32.totalorder %s22, 0
        %s842 = scalar_select %p841, %s22, 0
        %p843 = scmp.lt.s32.totalorder %s840, 7
        %s844 = scalar_select %p843, %s840, 7
        %s845 = smul.addr %s842, 8
        %s846 = sadd.s32 %s844, %s845
        %s847 = smul.addr %s846, 8
        %s848 = scalar_lea.vmem %s5, %s847
      $region60: #{sampling_base_forward.3} parent=55 // pred_fallthru
        _
    $region56: #{sampling_base_forward.3} parent=5 // pred_fallthru
      _
  $region6: #{sampling_base_forward.3} parent=0 // loop_footer
    %s15 = sadd.s32 1, %s11
  $region7: #{sampling_base_forward.3} parent=0 // loop_footer_branch
    %10 = sbr.rel target = $region3
  $region8: #{sampling_base_forward.3} parent=0 // loop_exit
    _

</llo_original>
